<compile_context>
chip_gen: v7x
topology: tpu7x:2x2x1
jax: 0.10.0
libtpu: 0.0.40
codegen_flags: <defaults>
</compile_context>

<pallas_src>
import functools
import math

import jax
import jax.numpy as jnp
from jax.experimental import pallas as pl
from jax.experimental.pallas import tpu as pltpu

LN_EPS = 1e-5  # torch.nn.LayerNorm default


def _round_up(x, m):
    return ((x + m - 1) // m) * m


def _patch_merge_kernel(x_ref, we_ref, wo_ref, s_ref, st_ref, b_ref, o_ref, *,
                        c, wm, pack):
    """One tile of merged-image rows.

    x_ref : (tile_i, 2*wm*2C)  -- [even image row | odd image row]
    we_ref: (gw, gw)  bf16     -- block-diag (pack blocks) weight for [x0|x2]
    wo_ref: (gw, gw)  bf16     -- block-diag weight for [x1|x3]
    s_ref : (wm*2C, wm) f32    -- lane -> pixel 0/1 indicator
    st_ref: (wm, wm*2C) f32    -- its transpose (pixel -> lanes broadcast)
    b_ref : (1, gw) f32        -- beta @ W, tiled over the pack group
    o_ref : (tile_i, wm*2C)
    """
    seg = 2 * c                # lanes per pixel per plane (== output lanes/pixel)
    half = wm * seg            # lanes per plane (one image row)
    gw = pack * seg            # 128-aligned lane-group width (pack pixels)

    xe = x_ref[:, pl.ds(0, half)].astype(jnp.float32)     # [x0 | x2] per pixel
    xo = x_ref[:, pl.ds(half, half)].astype(jnp.float32)  # [x1 | x3] per pixel

    # Per-pixel LayerNorm statistics over 4C (= both planes), via indicator
    # matmuls (stays f32 for accuracy; FLOPs are negligible, MXU is idle).
    s = s_ref[...]
    st = st_ref[...]
    inv4c = 1.0 / (4 * c)
    ssum = jnp.dot(xe + xo, s, preferred_element_type=jnp.float32)        # (t, wm)
    ssq = jnp.dot(xe * xe + xo * xo, s, preferred_element_type=jnp.float32)
    mean = ssum * inv4c
    var = jnp.maximum(ssq * inv4c - mean * mean, 0.0)                     # biased
    rstd = jax.lax.rsqrt(var + LN_EPS)
    mean_b = jnp.dot(mean, st, preferred_element_type=jnp.float32)        # (t, half)
    rstd_b = jnp.dot(rstd, st, preferred_element_type=jnp.float32)

    # Normalized activations in bf16 for the MXU; accumulate in f32.
    xne = ((xe - mean_b) * rstd_b).astype(jnp.bfloat16)
    xno = ((xo - mean_b) * rstd_b).astype(jnp.bfloat16)

    we = we_ref[...]
    wo = wo_ref[...]
    bias = b_ref[...]          # (1, gw) f32, broadcasts over rows

    for j in range(wm // pack):            # static, 128-aligned lane groups
        sl = slice(j * gw, (j + 1) * gw)
        acc = jnp.dot(xne[:, sl], we, preferred_element_type=jnp.float32)
        acc = acc + jnp.dot(xno[:, sl], wo, preferred_element_type=jnp.float32)
        o_ref[:, sl] = (acc + bias).astype(o_ref.dtype)


def _reference(x, gamma, beta, weight):
    """Pure-JAX f32 reference of PatchMerge.forward (unfused affine)."""
    x0 = x[:, 0::2, 0::2, :]
    x1 = x[:, 1::2, 0::2, :]
    x2 = x[:, 0::2, 1::2, :]
    x3 = x[:, 1::2, 1::2, :]
    xm = jnp.concatenate([x0, x1, x2, x3], axis=-1).astype(jnp.float32)
    mean = jnp.mean(xm, axis=-1, keepdims=True)
    var = jnp.mean((xm - mean) ** 2, axis=-1, keepdims=True)
    xn = (xm - mean) * jax.lax.rsqrt(var + LN_EPS) * gamma + beta
    return jnp.einsum(
        "bhwc,cd->bhwd", xn, weight.astype(jnp.float32),
        precision=jax.lax.Precision.HIGHEST,
    )


def patch_merge_forward(x, gamma, beta, weight, *, target_tile_bytes=2 * 1024 * 1024):
    """x: (B, H, W, C) channels-last.  gamma/beta: (4C,).  weight: (4C, 2C).

    Returns (B, H//2, W//2, 2C), matching PatchMerge.forward.
    """
    B, H, W, C = x.shape
    assert H % 2 == 0 and W % 2 == 0, "PatchMerge needs even spatial dims"
    Hm, Wm = H // 2, W // 2
    c2 = 2 * C
    out_dtype = x.dtype

    # Lane packing so pack*2C is a multiple of 128 (lane-dense stores + aligned slices).
    pack = 128 // math.gcd(c2, 128)
    if Wm % pack != 0:
        # TODO(synk): odd widths (Wm not a multiple of the lane-pack factor)
        # fall back to the pure-JAX path instead of a masked-store kernel.
        return _reference(x, gamma, beta, weight).astype(out_dtype)

    R0 = B * Hm                # merged-image rows (kernel row axis)
    half = Wm * c2             # lanes per plane  (= W*C)
    row = 2 * half             # kernel row width (= 2*W*C, two image rows)
    gw = pack * c2             # 128-aligned pixel-group width

    # Pure metadata reshape of the original buffer: no gather, no extra HBM pass.
    x2d = x.reshape(R0, row)

    # Fold LayerNorm affine into the projection and permute/split its rows to
    # the natural lane order of the reshaped input ([x0|x2] even, [x1|x3] odd).
    wf = weight.astype(jnp.float32) * gamma.astype(jnp.float32)[:, None]   # (4C,2C)
    we = jnp.concatenate([wf[0:C], wf[2 * C:3 * C]], axis=0)               # (2C,2C)
    wo = jnp.concatenate([wf[C:2 * C], wf[3 * C:4 * C]], axis=0)           # (2C,2C)
    eye = jnp.eye(pack, dtype=jnp.float32)
    we_bd = jnp.kron(eye, we).astype(jnp.bfloat16)                          # (gw,gw)
    wo_bd = jnp.kron(eye, wo).astype(jnp.bfloat16)
    bias = beta.astype(jnp.float32) @ weight.astype(jnp.float32)            # (2C,)
    bias_t = jnp.tile(bias, (pack,)).reshape(1, gw)

    # 0/1 segment indicator: lane l (within one plane) belongs to pixel l // 2C.
    lane_pix = jnp.arange(half, dtype=jnp.int32) // c2
    s_mat = (lane_pix[:, None] == jnp.arange(Wm, dtype=jnp.int32)[None, :]
             ).astype(jnp.float32)                                           # (half, Wm)
    st_mat = s_mat.T                                                         # (Wm, half)

    # Tile selection: ~2 MiB input tiles, sublane aligned, >=2 grid steps
    # whenever possible so both v7x TensorCores get work.
    itemsize = jnp.dtype(out_dtype).itemsize
    sub = 8 if itemsize >= 4 else 16
    row_bytes = row * itemsize
    if R0 <= sub:
        tile_i = R0
    else:
        tile_i = max(sub, (target_tile_bytes // row_bytes) // sub * sub)
        tile_i = min(tile_i, _round_up(pl.cdiv(R0, 2), sub))
        tile_i = min(tile_i, _round_up(R0, sub))
    grid = (pl.cdiv(R0, tile_i),)

    kernel = functools.partial(_patch_merge_kernel, c=C, wm=Wm, pack=pack)

    m = R0 * Wm  # merged pixels
    flops = 16 * m * pack * C * C + 8 * R0 * half * Wm   # block-diag + LN-stat dots
    bytes_accessed = (
        x2d.size * itemsize + R0 * half * itemsize
        + 2 * gw * gw * 2 + 2 * half * Wm * 4 + gw * 4
    )

    out2d = pl.pallas_call(
        kernel,
        out_shape=jax.ShapeDtypeStruct((R0, half), out_dtype),
        grid_spec=pltpu.PrefetchScalarGridSpec(
            num_scalar_prefetch=0,
            grid=grid,
            in_specs=[
                pl.BlockSpec((tile_i, row), lambda i: (i, 0)),   # x rows (contiguous)
                pl.BlockSpec((gw, gw), lambda i: (0, 0)),        # We (block-diag, bf16)
                pl.BlockSpec((gw, gw), lambda i: (0, 0)),        # Wo (block-diag, bf16)
                pl.BlockSpec((half, Wm), lambda i: (0, 0)),      # segment indicator
                pl.BlockSpec((Wm, half), lambda i: (0, 0)),      # its transpose
                pl.BlockSpec((1, gw), lambda i: (0, 0)),         # beta @ W (tiled)
            ],
            out_specs=pl.BlockSpec((tile_i, half), lambda i: (i, 0)),
        ),
        compiler_params=pltpu.CompilerParams(
            dimension_semantics=("parallel",),
            vmem_limit_bytes=32 * 1024 * 1024,
        ),
        cost_estimate=pl.CostEstimate(
            flops=flops, transcendentals=m, bytes_accessed=bytes_accessed),
    )(x2d, we_bd, wo_bd, s_mat, st_mat, bias_t)

    return out2d.reshape(B, Hm, Wm, c2)


if __name__ == "__main__":
    # Module config: dim = C = 32  ->  LayerNorm over 4C = 128, Linear 128 -> 64
    B, H, W, C = 2, 16, 16, 32
    key = jax.random.PRNGKey(0)
    kx, kw, kg, kb = jax.random.split(key, 4)

    x = jax.random.normal(kx, (B, H, W, C), dtype=jnp.float32)
    gamma = 1.0 + 0.1 * jax.random.normal(kg, (4 * C,), dtype=jnp.float32)
    beta = 0.02 * jax.random.normal(kb, (4 * C,), dtype=jnp.float32)
    # nn.Linear(4C, 2C).weight is (2C, 4C); y = x @ W.T -> store as (4C, 2C)
    weight = 0.02 * jax.random.normal(kw, (4 * C, 2 * C), dtype=jnp.float32)

    fwd = jax.jit(patch_merge_forward)
    out = jax.block_until_ready(fwd(x, gamma, beta, weight))

    ref = _reference(x, gamma, beta, weight)
    assert out.shape == (B, H // 2, W // 2, 2 * C), out.shape
    max_err = float(jnp.max(jnp.abs(out - ref)))
    # bf16 MXU operands (f32 accumulate / f32 LN stats) -> ~1e-3 level error.
    assert jnp.allclose(out, ref, atol=1e-2, rtol=1e-2), f"max abs err {max_err}"
    print("KERNEL_OK")
</pallas_src>

<mosaic_0001>
module attributes {stable_mosaic.version = 11 : i64} {
  func.func @_patch_merge_kernel(%arg0: i32, %arg1: memref<8x1024xf32, #tpu.memory_space<vmem>>, %arg2: memref<128x128xbf16, #tpu.memory_space<vmem>>, %arg3: memref<128x128xbf16, #tpu.memory_space<vmem>>, %arg4: memref<512x8xf32, #tpu.memory_space<vmem>>, %arg5: memref<8x512xf32, #tpu.memory_space<vmem>>, %arg6: memref<1x128xf32, #tpu.memory_space<vmem>>, %arg7: memref<8x512xf32, #tpu.memory_space<vmem>>) attributes {dimension_semantics = [#tpu.dimension_semantics<parallel>], iteration_bounds = array<i64: 2>, scalar_prefetch = 0 : i64, scratch_operands = 0 : i64, tpu.core_type = #tpu.core_type<tc>, window_params = [{transform_indices = @transform_0, window_bounds = array<i64: 8, 1024>}, {pipeline_mode = #tpu.pipeline_mode<synchronous>, transform_indices = @transform_1, window_bounds = array<i64: 128, 128>}, {pipeline_mode = #tpu.pipeline_mode<synchronous>, transform_indices = @transform_2, window_bounds = array<i64: 128, 128>}, {pipeline_mode = #tpu.pipeline_mode<synchronous>, transform_indices = @transform_3, window_bounds = array<i64: 512, 8>}, {pipeline_mode = #tpu.pipeline_mode<synchronous>, transform_indices = @transform_4, window_bounds = array<i64: 8, 512>}, {pipeline_mode = #tpu.pipeline_mode<synchronous>, transform_indices = @transform_5, window_bounds = array<i64: 1, 128>}, {transform_indices = @transform_6, window_bounds = array<i64: 8, 512>}]} {
    %c0 = arith.constant 0 : index
    %c0_0 = arith.constant 0 : index
    %0 = vector.load %arg1[%c0, %c0_0] : memref<8x1024xf32, #tpu.memory_space<vmem>>, vector<8x512xf32>
    %c0_1 = arith.constant 0 : index
    %c512 = arith.constant 512 : index
    %1 = vector.load %arg1[%c0_1, %c512] : memref<8x1024xf32, #tpu.memory_space<vmem>>, vector<8x512xf32>
    %c0_2 = arith.constant 0 : index
    %c0_3 = arith.constant 0 : index
    %2 = vector.load %arg4[%c0_2, %c0_3] : memref<512x8xf32, #tpu.memory_space<vmem>>, vector<512x8xf32>
    %c0_4 = arith.constant 0 : index
    %c0_5 = arith.constant 0 : index
    %3 = vector.load %arg5[%c0_4, %c0_5] : memref<8x512xf32, #tpu.memory_space<vmem>>, vector<8x512xf32>
    %4 = arith.addf %0, %1 : vector<8x512xf32>
    %cst = arith.constant dense<0.000000e+00> : vector<8x8xf32>
    %5 = tpu.matmul %4, %2, %cst {dimension_numbers = #tpu.dot_dimension_numbers<[1], [0], [0], [1], [0, 0, 1, 1], [], []>} : vector<8x512xf32>, vector<512x8xf32>, vector<8x8xf32> -> vector<8x8xf32>
    %6 = arith.mulf %0, %0 : vector<8x512xf32>
    %7 = arith.mulf %1, %1 : vector<8x512xf32>
    %8 = arith.addf %6, %7 : vector<8x512xf32>
    %cst_6 = arith.constant dense<0.000000e+00> : vector<8x8xf32>
    %9 = tpu.matmul %8, %2, %cst_6 {dimension_numbers = #tpu.dot_dimension_numbers<[1], [0], [0], [1], [0, 0, 1, 1], [], []>} : vector<8x512xf32>, vector<512x8xf32>, vector<8x8xf32> -> vector<8x8xf32>
    %cst_7 = arith.constant 7.812500e-03 : f32
    %10 = vector.broadcast %cst_7 : f32 to vector<8x8xf32>
    %11 = arith.mulf %5, %10 : vector<8x8xf32>
    %cst_8 = arith.constant 7.812500e-03 : f32
    %12 = vector.broadcast %cst_8 : f32 to vector<8x8xf32>
    %13 = arith.mulf %9, %12 : vector<8x8xf32>
    %14 = arith.mulf %11, %11 : vector<8x8xf32>
    %15 = arith.subf %13, %14 : vector<8x8xf32>
    %cst_9 = arith.constant 0.000000e+00 : f32
    %16 = vector.broadcast %cst_9 : f32 to vector<8x8xf32>
    %17 = arith.maximumf %15, %16 : vector<8x8xf32>
    %cst_10 = arith.constant 9.99999974E-6 : f32
    %18 = vector.broadcast %cst_10 : f32 to vector<8x8xf32>
    %19 = arith.addf %17, %18 : vector<8x8xf32>
    %20 = math.rsqrt %19 : vector<8x8xf32>
    %cst_11 = arith.constant dense<0.000000e+00> : vector<8x512xf32>
    %21 = tpu.matmul %11, %3, %cst_11 {dimension_numbers = #tpu.dot_dimension_numbers<[1], [0], [0], [1], [0, 0, 1, 1], [], []>} : vector<8x8xf32>, vector<8x512xf32>, vector<8x512xf32> -> vector<8x512xf32>
    %cst_12 = arith.constant dense<0.000000e+00> : vector<8x512xf32>
    %22 = tpu.matmul %20, %3, %cst_12 {dimension_numbers = #tpu.dot_dimension_numbers<[1], [0], [0], [1], [0, 0, 1, 1], [], []>} : vector<8x8xf32>, vector<8x512xf32>, vector<8x512xf32> -> vector<8x512xf32>
    %23 = arith.subf %0, %21 : vector<8x512xf32>
    %24 = arith.mulf %23, %22 : vector<8x512xf32>
    %25 = arith.truncf %24 : vector<8x512xf32> to vector<8x512xbf16>
    %26 = arith.subf %1, %21 : vector<8x512xf32>
    %27 = arith.mulf %26, %22 : vector<8x512xf32>
    %28 = arith.truncf %27 : vector<8x512xf32> to vector<8x512xbf16>
    %c0_13 = arith.constant 0 : index
    %c0_14 = arith.constant 0 : index
    %29 = vector.load %arg2[%c0_13, %c0_14] : memref<128x128xbf16, #tpu.memory_space<vmem>>, vector<128x128xbf16>
    %c0_15 = arith.constant 0 : index
    %c0_16 = arith.constant 0 : index
    %30 = vector.load %arg3[%c0_15, %c0_16] : memref<128x128xbf16, #tpu.memory_space<vmem>>, vector<128x128xbf16>
    %c0_17 = arith.constant 0 : index
    %c0_18 = arith.constant 0 : index
    %31 = vector.load %arg6[%c0_17, %c0_18] : memref<1x128xf32, #tpu.memory_space<vmem>>, vector<1x128xf32>
    %32 = vector.extract_strided_slice %25 {offsets = [0, 0], sizes = [8, 128], strides = [1, 1]} : vector<8x512xbf16> to vector<8x128xbf16>
    %cst_19 = arith.constant dense<0.000000e+00> : vector<8x128xf32>
    %33 = tpu.matmul %32, %29, %cst_19 {dimension_numbers = #tpu.dot_dimension_numbers<[1], [0], [0], [1], [0, 0, 1, 1], [], []>} : vector<8x128xbf16>, vector<128x128xbf16>, vector<8x128xf32> -> vector<8x128xf32>
    %34 = vector.extract_strided_slice %28 {offsets = [0, 0], sizes = [8, 128], strides = [1, 1]} : vector<8x512xbf16> to vector<8x128xbf16>
    %cst_20 = arith.constant dense<0.000000e+00> : vector<8x128xf32>
    %35 = tpu.matmul %34, %30, %cst_20 {dimension_numbers = #tpu.dot_dimension_numbers<[1], [0], [0], [1], [0, 0, 1, 1], [], []>} : vector<8x128xbf16>, vector<128x128xbf16>, vector<8x128xf32> -> vector<8x128xf32>
    %36 = arith.addf %33, %35 : vector<8x128xf32>
    %37 = vector.broadcast %31 : vector<1x128xf32> to vector<8x128xf32>
    %38 = arith.addf %36, %37 : vector<8x128xf32>
    %c0_21 = arith.constant 0 : index
    %c0_22 = arith.constant 0 : index
    %39 = vector.load %arg7[%c0_21, %c0_22] : memref<8x512xf32, #tpu.memory_space<vmem>>, vector<8x128xf32>
    tpu.vector_store %arg7[%c0_21, %c0_22], %38 {strides = array<i32>} : memref<8x512xf32, #tpu.memory_space<vmem>>, vector<8x128xf32>,
    %40 = vector.extract_strided_slice %25 {offsets = [0, 128], sizes = [8, 128], strides = [1, 1]} : vector<8x512xbf16> to vector<8x128xbf16>
    %cst_23 = arith.constant dense<0.000000e+00> : vector<8x128xf32>
    %41 = tpu.matmul %40, %29, %cst_23 {dimension_numbers = #tpu.dot_dimension_numbers<[1], [0], [0], [1], [0, 0, 1, 1], [], []>} : vector<8x128xbf16>, vector<128x128xbf16>, vector<8x128xf32> -> vector<8x128xf32>
    %42 = vector.extract_strided_slice %28 {offsets = [0, 128], sizes = [8, 128], strides = [1, 1]} : vector<8x512xbf16> to vector<8x128xbf16>
    %cst_24 = arith.constant dense<0.000000e+00> : vector<8x128xf32>
    %43 = tpu.matmul %42, %30, %cst_24 {dimension_numbers = #tpu.dot_dimension_numbers<[1], [0], [0], [1], [0, 0, 1, 1], [], []>} : vector<8x128xbf16>, vector<128x128xbf16>, vector<8x128xf32> -> vector<8x128xf32>
    %44 = arith.addf %41, %43 : vector<8x128xf32>
    %45 = vector.broadcast %31 : vector<1x128xf32> to vector<8x128xf32>
    %46 = arith.addf %44, %45 : vector<8x128xf32>
    %c0_25 = arith.constant 0 : index
    %c128 = arith.constant 128 : index
    %47 = vector.load %arg7[%c0_25, %c128] : memref<8x512xf32, #tpu.memory_space<vmem>>, vector<8x128xf32>
    tpu.vector_store %arg7[%c0_25, %c128], %46 {strides = array<i32>} : memref<8x512xf32, #tpu.memory_space<vmem>>, vector<8x128xf32>,
    %48 = vector.extract_strided_slice %25 {offsets = [0, 256], sizes = [8, 128], strides = [1, 1]} : vector<8x512xbf16> to vector<8x128xbf16>
    %cst_26 = arith.constant dense<0.000000e+00> : vector<8x128xf32>
    %49 = tpu.matmul %48, %29, %cst_26 {dimension_numbers = #tpu.dot_dimension_numbers<[1], [0], [0], [1], [0, 0, 1, 1], [], []>} : vector<8x128xbf16>, vector<128x128xbf16>, vector<8x128xf32> -> vector<8x128xf32>
    %50 = vector.extract_strided_slice %28 {offsets = [0, 256], sizes = [8, 128], strides = [1, 1]} : vector<8x512xbf16> to vector<8x128xbf16>
    %cst_27 = arith.constant dense<0.000000e+00> : vector<8x128xf32>
    %51 = tpu.matmul %50, %30, %cst_27 {dimension_numbers = #tpu.dot_dimension_numbers<[1], [0], [0], [1], [0, 0, 1, 1], [], []>} : vector<8x128xbf16>, vector<128x128xbf16>, vector<8x128xf32> -> vector<8x128xf32>
    %52 = arith.addf %49, %51 : vector<8x128xf32>
    %53 = vector.broadcast %31 : vector<1x128xf32> to vector<8x128xf32>
    %54 = arith.addf %52, %53 : vector<8x128xf32>
    %c0_28 = arith.constant 0 : index
    %c256 = arith.constant 256 : index
    %55 = vector.load %arg7[%c0_28, %c256] : memref<8x512xf32, #tpu.memory_space<vmem>>, vector<8x128xf32>
    tpu.vector_store %arg7[%c0_28, %c256], %54 {strides = array<i32>} : memref<8x512xf32, #tpu.memory_space<vmem>>, vector<8x128xf32>,
    %56 = vector.extract_strided_slice %25 {offsets = [0, 384], sizes = [8, 128], strides = [1, 1]} : vector<8x512xbf16> to vector<8x128xbf16>
    %cst_29 = arith.constant dense<0.000000e+00> : vector<8x128xf32>
    %57 = tpu.matmul %56, %29, %cst_29 {dimension_numbers = #tpu.dot_dimension_numbers<[1], [0], [0], [1], [0, 0, 1, 1], [], []>} : vector<8x128xbf16>, vector<128x128xbf16>, vector<8x128xf32> -> vector<8x128xf32>
    %58 = vector.extract_strided_slice %28 {offsets = [0, 384], sizes = [8, 128], strides = [1, 1]} : vector<8x512xbf16> to vector<8x128xbf16>
    %cst_30 = arith.constant dense<0.000000e+00> : vector<8x128xf32>
    %59 = tpu.matmul %58, %30, %cst_30 {dimension_numbers = #tpu.dot_dimension_numbers<[1], [0], [0], [1], [0, 0, 1, 1], [], []>} : vector<8x128xbf16>, vector<128x128xbf16>, vector<8x128xf32> -> vector<8x128xf32>
    %60 = arith.addf %57, %59 : vector<8x128xf32>
    %61 = vector.broadcast %31 : vector<1x128xf32> to vector<8x128xf32>
    %62 = arith.addf %60, %61 : vector<8x128xf32>
    %c0_31 = arith.constant 0 : index
    %c384 = arith.constant 384 : index
    %63 = vector.load %arg7[%c0_31, %c384] : memref<8x512xf32, #tpu.memory_space<vmem>>, vector<8x128xf32>
    tpu.vector_store %arg7[%c0_31, %c384], %62 {strides = array<i32>} : memref<8x512xf32, #tpu.memory_space<vmem>>, vector<8x128xf32>,
    return
  }
  func.func @transform_0(%arg0: i32) -> (i32, i32) {
    %c0_i32 = arith.constant 0 : i32
    %c0_i32_0 = arith.constant 0 : i32
    return %arg0, %c0_i32 : i32, i32
  }
  func.func @transform_1(%arg0: i32) -> (i32, i32) {
    %c0_i32 = arith.constant 0 : i32
    %c0_i32_0 = arith.constant 0 : i32
    %c0_i32_1 = arith.constant 0 : i32
    return %c0_i32, %c0_i32_0 : i32, i32
  }
  func.func @transform_2(%arg0: i32) -> (i32, i32) {
    %c0_i32 = arith.constant 0 : i32
    %c0_i32_0 = arith.constant 0 : i32
    %c0_i32_1 = arith.constant 0 : i32
    return %c0_i32, %c0_i32_0 : i32, i32
  }
  func.func @transform_3(%arg0: i32) -> (i32, i32) {
    %c0_i32 = arith.constant 0 : i32
    %c0_i32_0 = arith.constant 0 : i32
    %c0_i32_1 = arith.constant 0 : i32
    return %c0_i32, %c0_i32_0 : i32, i32
  }
  func.func @transform_4(%arg0: i32) -> (i32, i32) {
    %c0_i32 = arith.constant 0 : i32
    %c0_i32_0 = arith.constant 0 : i32
    %c0_i32_1 = arith.constant 0 : i32
    return %c0_i32, %c0_i32_0 : i32, i32
  }
  func.func @transform_5(%arg0: i32) -> (i32, i32) {
    %c0_i32 = arith.constant 0 : i32
    %c0_i32_0 = arith.constant 0 : i32
    %c0_i32_1 = arith.constant 0 : i32
    return %c0_i32, %c0_i32_0 : i32, i32
  }
  func.func @transform_6(%arg0: i32) -> (i32, i32) {
    %c0_i32 = arith.constant 0 : i32
    %c0_i32_0 = arith.constant 0 : i32
    return %arg0, %c0_i32 : i32, i32
  }
}

</mosaic_0001>

<llo_original>
// kernel: tile.8
$region0: #{tile.8}
  #allocation0 [shape = 's32[1]{0}', space=sflag, size = 0x4, scoped, tag = 'scoped memory for tile.8']
  %s0 = inlined_call_operand.vmem [shape: f32[64], index: 0, kind: input, shape index: {}]
  %s1 = inlined_call_operand.vmem [shape: f32[2,64], index: 1, kind: output, shape index: {}]
  // Predicated region
  $region2: #{tile.8} parent=0 // pred_check
    _
  $region3: #{tile.8} parent=0 // pred_check_branch
    %3 = sbr.rel (0) target = $region5
  $region4: #{tile.8} parent=0 // pred_region
    _
  $region5: #{tile.8} parent=0 // pred_fallthru
    _
  %v4 = vld [vmem:[%s0] ss:$0 sm:$0xff]
  %5 = vst [vmem:[%s1] sm:$0x3] %v4

// kernel: tile.9
$region0: #{tile.9}
  %s0 = inlined_call_operand.vmem [shape: f32[2,64], index: 0, kind: input, shape index: {}]
  %s1 = inlined_call_operand.vmem [shape: f32[1,128], index: 1, kind: output, shape index: {}]
  $region1: #{tile.9} parent=0
    #allocation0 [shape = 'u8[4096]{0}', space=vmem, size = 0x1000, scoped, tag = 'scoped mem for output reshape']
    #allocation1 [shape = 'u8[4096]{0}', space=vmem, size = 0x1000, scoped, tag = 'scoped mem for input reshape']
    %s3 = sshllo.u32 0, 2
    %v4 = vld [vmem:[%s0] sm:%s3]
    %5 = vst [vmem:[#allocation1] sm:%s3] %v4
    %v6 = vld [vmem:[#allocation1] sm:$0x1]
    %vm7 = vcmask 523264
    %8 = vst.msk [vmem:[#allocation0] sm:$0x1] %vm7, %v6
    %s9 = scalar_lea.vmem [#allocation1], 1
    %v10 = vld [vmem:[%s9] sm:$0x1]
    %11 = vrot.lane.b32.xlu0 %v10, 64
    %v12 = vpop.permute.xlu0 %11
    %vm13 = vcmask 1048064
    %14 = vst.msk [vmem:[#allocation0] sm:$0x1] %vm13, %v12
    %s16 = sshllo.u32 0, 1
    %v18 = vld [vmem:[#allocation0] sm:%s16]
    %s19 = sshllo.u32 0, 1
    %20 = vst [vmem:[%s1] sm:%s19] %v18

// kernel: patch_merge_forward.1
$region0: #{patch_merge_forward.1}
  #allocation0 [shape = 'u32[]', space=smem, size = 0x4, offset = 0x4, fixed_abs, tag = 'smem constant byte address 0x4 - core index']
  #allocation1 [shape = 'u32[144,128]{1,0:T(1,128)}', space=vmem, size = 0x12000, scoped, tag = 'internal scratch']
  %s0 = inlined_call_operand.vmem [shape: f32[16,1024], index: 0, kind: input, shape index: {}]
  %s1 = inlined_call_operand.vmem [shape: bf16[128,128], index: 1, kind: input, shape index: {}]
  %s2 = inlined_call_operand.vmem [shape: bf16[128,128], index: 2, kind: input, shape index: {}]
  %s3 = inlined_call_operand.vmem [shape: f32[512,8], index: 3, kind: input, shape index: {}]
  %s4 = inlined_call_operand.vmem [shape: f32[8,512], index: 4, kind: input, shape index: {}]
  %s5 = inlined_call_operand.vmem [shape: f32[1,128], index: 5, kind: input, shape index: {}]
  %s6 = inlined_call_operand.vmem [shape: f32[16,512], index: 6, kind: output, shape index: {}]
  %s7 = sld [smem:[#allocation0]]
  $region57: #{patch_merge_forward.1} parent=0
    _
  %s9 = ssub.s32 1, %s7
  %s10 = scalar_select 0, %s9, %s7
  loop: start=0, step=1, limit=4
  $region2: #{patch_merge_forward.1} parent=0 // loop_pre_header
    _
  $region3: #{patch_merge_forward.1} parent=0 // loop_header
    %s12 = sphi 0, %s16
    %p13 = scmp.ge.s32.totalorder %s12, 4
    %s22 = sphi 0, %s24
    %s25 = sphi 0, %s22
    %s26 = sphi 0, %s25
    %s42 = sphi 0, %s26
    %s46 = sphi 0, %s46
    %s48 = sphi 0, %s46
    %s49 = sphi 0, %s48
    %s63 = sphi 0, %s49
    %s67 = sphi 0, %s67
    %s69 = sphi 0, %s67
    %s70 = sphi 0, %s69
    %s84 = sphi 0, %s70
    %s88 = sphi 0, %s88
    %s90 = sphi 0, %s88
    %s91 = sphi 0, %s90
    %s105 = sphi 0, %s91
    %s109 = sphi 0, %s109
    %s111 = sphi 0, %s109
    %s112 = sphi 0, %s111
    %s126 = sphi 0, %s112
    %s130 = sphi 0, %s130
    %s132 = sphi 0, %s130
    %s133 = sphi 0, %s132
    %s147 = sphi 0, %s133
    %s153 = sphi 0, %s155
    %s156 = sphi 0, %s153
    %s157 = sphi 0, %s156
    %s173 = sphi 0, %s157
  $region4: #{patch_merge_forward.1} parent=0 // loop_header_branch
    %15 = sbr.rel (%p13) target = $region8
  $region5: #{patch_merge_forward.1} parent=0 // loop_body
    %s17 = ssub.s32 %s12, 1
    %s18 = ssub.s32 %s12, 2
    %s19 = sadd.s32 %s12, 1
    %s20 = ssub.s32 %s12, %s19
    %p21 = scmp.eq.s32.totalorder %s20, 0
    %s23 = sadd.s32 %s22, 1
    %s24 = scalar_select %p21, %s22, %s23
    %p27 = pneg %p21
    %p28 = scmp.eq.s32.totalorder %s12, 1
    %p29 = por %p27, %p28
    %p30 = scmp.ne.s32.totalorder %s22, %s25
    %p31 = scmp.eq.s32.totalorder %s12, 0
    %p32 = por %p30, %p31
    %p33 = scmp.ne.s32.totalorder %s22, %s25
    %p34 = scmp.eq.s32.totalorder %s17, 1
    %p35 = por %p33, %p34
    %p36 = scmp.ne.s32.totalorder %s25, %s26
    %p37 = scmp.eq.s32.totalorder %s17, 0
    %p38 = por %p36, %p37
    %p39 = scmp.ne.s32.totalorder %s25, %s26
    %p40 = scmp.eq.s32.totalorder %s18, 1
    %p41 = por %p39, %p40
    %p43 = scmp.ne.s32.totalorder %s26, %s42
    %p44 = scmp.eq.s32.totalorder %s18, 0
    %p45 = por %p43, %p44
    %s47 = sadd.s32 %s46, 1
    %p50 = scmp.eq.s32.totalorder %s12, 1
    %p51 = scmp.ne.s32.totalorder %s46, %s48
    %p52 = scmp.eq.s32.totalorder %s12, 0
    %p53 = por %p51, %p52
    %p54 = scmp.ne.s32.totalorder %s46, %s48
    %p55 = scmp.eq.s32.totalorder %s17, 1
    %p56 = por %p54, %p55
    %p57 = scmp.ne.s32.totalorder %s48, %s49
    %p58 = scmp.eq.s32.totalorder %s17, 0
    %p59 = por %p57, %p58
    %p60 = scmp.ne.s32.totalorder %s48, %s49
    %p61 = scmp.eq.s32.totalorder %s18, 1
    %p62 = por %p60, %p61
    %p64 = scmp.ne.s32.totalorder %s49, %s63
    %p65 = scmp.eq.s32.totalorder %s18, 0
    %p66 = por %p64, %p65
    %s68 = sadd.s32 %s67, 1
    %p71 = scmp.eq.s32.totalorder %s12, 1
    %p72 = scmp.ne.s32.totalorder %s67, %s69
    %p73 = scmp.eq.s32.totalorder %s12, 0
    %p74 = por %p72, %p73
    %p75 = scmp.ne.s32.totalorder %s67, %s69
    %p76 = scmp.eq.s32.totalorder %s17, 1
    %p77 = por %p75, %p76
    %p78 = scmp.ne.s32.totalorder %s69, %s70
    %p79 = scmp.eq.s32.totalorder %s17, 0
    %p80 = por %p78, %p79
    %p81 = scmp.ne.s32.totalorder %s69, %s70
    %p82 = scmp.eq.s32.totalorder %s18, 1
    %p83 = por %p81, %p82
    %p85 = scmp.ne.s32.totalorder %s70, %s84
    %p86 = scmp.eq.s32.totalorder %s18, 0
    %p87 = por %p85, %p86
    %s89 = sadd.s32 %s88, 1
    %p92 = scmp.eq.s32.totalorder %s12, 1
    %p93 = scmp.ne.s32.totalorder %s88, %s90
    %p94 = scmp.eq.s32.totalorder %s12, 0
    %p95 = por %p93, %p94
    %p96 = scmp.ne.s32.totalorder %s88, %s90
    %p97 = scmp.eq.s32.totalorder %s17, 1
    %p98 = por %p96, %p97
    %p99 = scmp.ne.s32.totalorder %s90, %s91
    %p100 = scmp.eq.s32.totalorder %s17, 0
    %p101 = por %p99, %p100
    %p102 = scmp.ne.s32.totalorder %s90, %s91
    %p103 = scmp.eq.s32.totalorder %s18, 1
    %p104 = por %p102, %p103
    %p106 = scmp.ne.s32.totalorder %s91, %s105
    %p107 = scmp.eq.s32.totalorder %s18, 0
    %p108 = por %p106, %p107
    %s110 = sadd.s32 %s109, 1
    %p113 = scmp.eq.s32.totalorder %s12, 1
    %p114 = scmp.ne.s32.totalorder %s109, %s111
    %p115 = scmp.eq.s32.totalorder %s12, 0
    %p116 = por %p114, %p115
    %p117 = scmp.ne.s32.totalorder %s109, %s111
    %p118 = scmp.eq.s32.totalorder %s17, 1
    %p119 = por %p117, %p118
    %p120 = scmp.ne.s32.totalorder %s111, %s112
    %p121 = scmp.eq.s32.totalorder %s17, 0
    %p122 = por %p120, %p121
    %p123 = scmp.ne.s32.totalorder %s111, %s112
    %p124 = scmp.eq.s32.totalorder %s18, 1
    %p125 = por %p123, %p124
    %p127 = scmp.ne.s32.totalorder %s112, %s126
    %p128 = scmp.eq.s32.totalorder %s18, 0
    %p129 = por %p127, %p128
    %s131 = sadd.s32 %s130, 1
    %p134 = scmp.eq.s32.totalorder %s12, 1
    %p135 = scmp.ne.s32.totalorder %s130, %s132
    %p136 = scmp.eq.s32.totalorder %s12, 0
    %p137 = por %p135, %p136
    %p138 = scmp.ne.s32.totalorder %s130, %s132
    %p139 = scmp.eq.s32.totalorder %s17, 1
    %p140 = por %p138, %p139
    %p141 = scmp.ne.s32.totalorder %s132, %s133
    %p142 = scmp.eq.s32.totalorder %s17, 0
    %p143 = por %p141, %p142
    %p144 = scmp.ne.s32.totalorder %s132, %s133
    %p145 = scmp.eq.s32.totalorder %s18, 1
    %p146 = por %p144, %p145
    %p148 = scmp.ne.s32.totalorder %s133, %s147
    %p149 = scmp.eq.s32.totalorder %s18, 0
    %p150 = por %p148, %p149
    %s151 = ssub.s32 %s12, %s19
    %p152 = scmp.eq.s32.totalorder %s151, 0
    %s154 = sadd.s32 %s153, 1
    %s155 = scalar_select %p152, %s153, %s154
    %p158 = pneg %p152
    %p159 = scmp.eq.s32.totalorder %s12, 1
    %p160 = por %p158, %p159
    %p161 = scmp.ne.s32.totalorder %s153, %s156
    %p162 = scmp.eq.s32.totalorder %s12, 0
    %p163 = por %p161, %p162
    %p164 = scmp.ne.s32.totalorder %s153, %s156
    %p165 = scmp.eq.s32.totalorder %s17, 1
    %p166 = por %p164, %p165
    %p167 = scmp.ne.s32.totalorder %s156, %s157
    %p168 = scmp.eq.s32.totalorder %s17, 0
    %p169 = por %p167, %p168
    %p170 = scmp.ne.s32.totalorder %s156, %s157
    %p171 = scmp.eq.s32.totalorder %s18, 1
    %p172 = por %p170, %p171
    %p174 = scmp.ne.s32.totalorder %s157, %s173
    %p175 = scmp.eq.s32.totalorder %s18, 0
    %p176 = por %p174, %p175
    %p177 = scmp.le.s32.totalorder 1, %s12
    %p178 = scmp.lt.s32.totalorder %s12, 3
    %p179 = pnand %p177, %p178
    %p180 = pneg %p179
    // Predicated region
    $region9: #{patch_merge_forward.1} parent=5 // pred_check
      _
    $region10: #{patch_merge_forward.1} parent=5 // pred_check_branch
      %182 = sbr.rel (%p179) target = $region12
    $region11: #{patch_merge_forward.1} parent=5 // pred_region
      %s183 = ssub.s32 %s12, 1
      // Predicated region
      $region13: #{patch_merge_forward.1} parent=11 // pred_check
        %p184 = pneg %p59
      $region14: #{patch_merge_forward.1} parent=11 // pred_check_branch
        %186 = sbr.rel (%p184) target = $region16
      $region15: #{patch_merge_forward.1} parent=11 // pred_region
        _
      $region16: #{patch_merge_forward.1} parent=11 // pred_fallthru
        _
      // Predicated region
      $region17: #{patch_merge_forward.1} parent=11 // pred_check
        %p187 = pneg %p80
      $region18: #{patch_merge_forward.1} parent=11 // pred_check_branch
        %189 = sbr.rel (%p187) target = $region20
      $region19: #{patch_merge_forward.1} parent=11 // pred_region
        _
      $region20: #{patch_merge_forward.1} parent=11 // pred_fallthru
        _
      // Predicated region
      $region21: #{patch_merge_forward.1} parent=11 // pred_check
        %p190 = pneg %p101
      $region22: #{patch_merge_forward.1} parent=11 // pred_check_branch
        %192 = sbr.rel (%p190) target = $region24
      $region23: #{patch_merge_forward.1} parent=11 // pred_region
        _
      $region24: #{patch_merge_forward.1} parent=11 // pred_fallthru
        _
      // Predicated region
      $region25: #{patch_merge_forward.1} parent=11 // pred_check
        %p193 = pneg %p122
      $region26: #{patch_merge_forward.1} parent=11 // pred_check_branch
        %195 = sbr.rel (%p193) target = $region28
      $region27: #{patch_merge_forward.1} parent=11 // pred_region
        _
      $region28: #{patch_merge_forward.1} parent=11 // pred_fallthru
        _
      // Predicated region
      $region29: #{patch_merge_forward.1} parent=11 // pred_check
        %p196 = pneg %p143
      $region30: #{patch_merge_forward.1} parent=11 // pred_check_branch
        %198 = sbr.rel (%p196) target = $region32
      $region31: #{patch_merge_forward.1} parent=11 // pred_region
        _
      $region32: #{patch_merge_forward.1} parent=11 // pred_fallthru
        _
    $region12: #{patch_merge_forward.1} parent=5 // pred_fallthru
      _
    %p199 = scmp.lt.s32.totalorder %s12, 2
    // Predicated region
    $region33: #{patch_merge_forward.1} parent=5 // pred_check
      %p200 = pneg %p199
    $region34: #{patch_merge_forward.1} parent=5 // pred_check_branch
      %202 = sbr.rel (%p200) target = $region36
    $region35: #{patch_merge_forward.1} parent=5 // pred_region
      // Predicated region
      $region37: #{patch_merge_forward.1} parent=35 // pred_check
        %p203 = pneg %p32
      $region38: #{patch_merge_forward.1} parent=35 // pred_check_branch
        %205 = sbr.rel (%p203) target = $region40
      $region39: #{patch_merge_forward.1} parent=35 // pred_region
        %p206 = scmp.lt.s32.totalorder %s12, 1
        %s207 = scalar_select %p206, %s12, 1
        %s208 = smul.addr %s207, 8
        %s209 = smul.addr %s208, 8
        %s210 = scalar_lea.vmem %s0, %s209
      $region40: #{patch_merge_forward.1} parent=35 // pred_fallthru
        _
    $region36: #{patch_merge_forward.1} parent=5 // pred_fallthru
      _
    %p211 = scmp.le.s32.totalorder 1, %s12
    %p212 = scmp.lt.s32.totalorder %s12, 3
    %p213 = pnand %p211, %p212
    %p214 = pneg %p213
    // Predicated region
    $region41: #{patch_merge_forward.1} parent=5 // pred_check
      _
    $region42: #{patch_merge_forward.1} parent=5 // pred_check_branch
      %216 = sbr.rel (%p213) target = $region44
    $region43: #{patch_merge_forward.1} parent=5 // pred_region
      %s217 = ssub.s32 %s12, 1
      %p218 = scmp.lt.s32.totalorder %s17, 1
      %s219 = scalar_select %p218, %s17, 1
      %s220 = smul.addr %s219, 8
      %s221 = smul.addr %s220, 8
      %s222 = scalar_lea.vmem %s0, %s221
      %p223 = pneg %p38
      %p224 = pneg %p35
      %p225 = pneg %p59
      %p226 = pneg %p56
      %p227 = pneg %p80
      %p228 = pneg %p77
      %p229 = pneg %p101
      %p230 = pneg %p98
      %p231 = pneg %p122
      %p232 = pneg %p119
      %p233 = pneg %p143
      %p234 = pneg %p140
      %p235 = pneg %p169
      %p236 = pneg %p166
      %p237 = scmp.lt.s32.totalorder %s17, 1
      %s238 = scalar_select %p237, %s17, 1
      %s239 = smul.addr %s238, 4
      %s240 = smul.addr %s239, 8
      %s241 = scalar_lea.vmem %s6, %s240
      %p242 = scmp.lt.s32.totalorder %s17, 1
      %s243 = scalar_select %p242, %s17, 1
      %s244 = smul.addr %s243, 8
      %s245 = smul.addr %s244, 8
      %s246 = scalar_lea.vmem %s0, %s245
      %p247 = scmp.lt.s32.totalorder %s17, 1
      %s248 = scalar_select %p247, %s17, 1
      %s249 = smul.addr %s248, 4
      %s250 = smul.addr %s249, 8
      %s251 = scalar_lea.vmem %s6, %s250
      %v253 = vld [vmem:[%s246] sm:$0xff]
      %v254 = vld [vmem:[%s246 + $0x8] sm:$0xff]
      %v255 = vld [vmem:[%s246 + $0x10] sm:$0xff]
      %v256 = vld [vmem:[%s246 + $0x18] sm:$0xff]
      %v257 = vld [vmem:[%s246 + $0x20] sm:$0xff]
      %v258 = vld [vmem:[%s246 + $0x28] sm:$0xff]
      %v259 = vld [vmem:[%s246 + $0x30] sm:$0xff]
      %v260 = vld [vmem:[%s246 + $0x38] sm:$0xff]
      %v261 = vld [vmem:[%s3] sm:$0xff]
      %v262 = vld [vmem:[%s3 + $0x8] sm:$0xff]
      %v263 = vld [vmem:[%s3 + $0x10] sm:$0xff]
      %v264 = vld [vmem:[%s3 + $0x18] sm:$0xff]
      %v265 = vld [vmem:[%s3 + $0x20] sm:$0xff]
      %v266 = vld [vmem:[%s3 + $0x28] sm:$0xff]
      %v267 = vld [vmem:[%s3 + $0x30] sm:$0xff]
      %v268 = vld [vmem:[%s3 + $0x38] sm:$0xff]
      %v269 = vld [vmem:[%s3 + $0x40] sm:$0xff]
      %v270 = vld [vmem:[%s3 + $0x48] sm:$0xff]
      %v271 = vld [vmem:[%s3 + $0x50] sm:$0xff]
      %v272 = vld [vmem:[%s3 + $0x58] sm:$0xff]
      %v273 = vld [vmem:[%s3 + $0x60] sm:$0xff]
      %v274 = vld [vmem:[%s3 + $0x68] sm:$0xff]
      %v275 = vld [vmem:[%s3 + $0x70] sm:$0xff]
      %v276 = vld [vmem:[%s3 + $0x78] sm:$0xff]
      %v277 = vld [vmem:[%s3 + $0x80] sm:$0xff]
      %v278 = vld [vmem:[%s3 + $0x88] sm:$0xff]
      %v279 = vld [vmem:[%s3 + $0x90] sm:$0xff]
      %v280 = vld [vmem:[%s3 + $0x98] sm:$0xff]
      %v281 = vld [vmem:[%s3 + $0xa0] sm:$0xff]
      %v282 = vld [vmem:[%s3 + $0xa8] sm:$0xff]
      %v283 = vld [vmem:[%s3 + $0xb0] sm:$0xff]
      %v284 = vld [vmem:[%s3 + $0xb8] sm:$0xff]
      %v285 = vld [vmem:[%s3 + $0xc0] sm:$0xff]
      %v286 = vld [vmem:[%s3 + $0xc8] sm:$0xff]
      %v287 = vld [vmem:[%s3 + $0xd0] sm:$0xff]
      %v288 = vld [vmem:[%s3 + $0xd8] sm:$0xff]
      %v289 = vld [vmem:[%s3 + $0xe0] sm:$0xff]
      %v290 = vld [vmem:[%s3 + $0xe8] sm:$0xff]
      %v291 = vld [vmem:[%s3 + $0xf0] sm:$0xff]
      %v292 = vld [vmem:[%s3 + $0xf8] sm:$0xff]
      %v293 = vld [vmem:[%s3 + $0x100] sm:$0xff]
      %v294 = vld [vmem:[%s3 + $0x108] sm:$0xff]
      %v295 = vld [vmem:[%s3 + $0x110] sm:$0xff]
      %v296 = vld [vmem:[%s3 + $0x118] sm:$0xff]
      %v297 = vld [vmem:[%s3 + $0x120] sm:$0xff]
      %v298 = vld [vmem:[%s3 + $0x128] sm:$0xff]
      %v299 = vld [vmem:[%s3 + $0x130] sm:$0xff]
      %v300 = vld [vmem:[%s3 + $0x138] sm:$0xff]
      %v301 = vld [vmem:[%s3 + $0x140] sm:$0xff]
      %v302 = vld [vmem:[%s3 + $0x148] sm:$0xff]
      %v303 = vld [vmem:[%s3 + $0x150] sm:$0xff]
      %v304 = vld [vmem:[%s3 + $0x158] sm:$0xff]
      %v305 = vld [vmem:[%s3 + $0x160] sm:$0xff]
      %v306 = vld [vmem:[%s3 + $0x168] sm:$0xff]
      %v307 = vld [vmem:[%s3 + $0x170] sm:$0xff]
      %v308 = vld [vmem:[%s3 + $0x178] sm:$0xff]
      %v309 = vld [vmem:[%s3 + $0x180] sm:$0xff]
      %v310 = vld [vmem:[%s3 + $0x188] sm:$0xff]
      %v311 = vld [vmem:[%s3 + $0x190] sm:$0xff]
      %v312 = vld [vmem:[%s3 + $0x198] sm:$0xff]
      %v313 = vld [vmem:[%s3 + $0x1a0] sm:$0xff]
      %v314 = vld [vmem:[%s3 + $0x1a8] sm:$0xff]
      %v315 = vld [vmem:[%s3 + $0x1b0] sm:$0xff]
      %v316 = vld [vmem:[%s3 + $0x1b8] sm:$0xff]
      %v317 = vld [vmem:[%s3 + $0x1c0] sm:$0xff]
      %v318 = vld [vmem:[%s3 + $0x1c8] sm:$0xff]
      %v319 = vld [vmem:[%s3 + $0x1d0] sm:$0xff]
      %v320 = vld [vmem:[%s3 + $0x1d8] sm:$0xff]
      %v321 = vld [vmem:[%s3 + $0x1e0] sm:$0xff]
      %v322 = vld [vmem:[%s3 + $0x1e8] sm:$0xff]
      %v323 = vld [vmem:[%s3 + $0x1f0] sm:$0xff]
      %v324 = vld [vmem:[%s3 + $0x1f8] sm:$0xff]
      %v325 = vld [vmem:[%s4] sm:$0xff]
      %v326 = vld [vmem:[%s4 + $0x8] sm:$0xff]
      %v327 = vld [vmem:[%s4 + $0x10] sm:$0xff]
      %v328 = vld [vmem:[%s4 + $0x18] sm:$0xff]
      %v329 = vadd.f32 %v253, %v257
      %v330 = vadd.f32 %v254, %v258
      %v331 = vadd.f32 %v255, %v259
      %v332 = vadd.f32 %v256, %v260
      %333 = vmatprep.subr.mxu0 0.0
      %334 = vmatpush1.msra.mxu0 %v261
      %335 = vmatprep.subr.mxu0 0.0
      %336 = vmatpush1.msra.mxu0 %v262
      %337 = vmatprep.subr.mxu0 0.0
      %338 = vmatpush1.msra.mxu0 %v263
      %339 = vmatprep.subr.mxu0 0.0
      %340 = vmatpush1.msra.mxu0 %v264
      %341 = vmatprep.subr.mxu0 0.0
      %342 = vmatpush1.msra.mxu0 %v265
      %343 = vmatprep.subr.mxu0 0.0
      %344 = vmatpush1.msra.mxu0 %v266
      %345 = vmatprep.subr.mxu0 0.0
      %346 = vmatpush1.msra.mxu0 %v267
      %347 = vmatprep.subr.mxu0 0.0
      %348 = vmatpush1.msra.mxu0 %v268
      %349 = vmatprep.subr.mxu0 0.0
      %350 = vmatpush1.msra.mxu0 %v269
      %351 = vmatprep.subr.mxu0 0.0
      %352 = vmatpush1.msra.mxu0 %v270
      %353 = vmatprep.subr.mxu0 0.0
      %354 = vmatpush1.msra.mxu0 %v271
      %355 = vmatprep.subr.mxu0 0.0
      %356 = vmatpush1.msra.mxu0 %v272
      %357 = vmatprep.subr.mxu0 0.0
      %358 = vmatpush1.msra.mxu0 %v273
      %359 = vmatprep.subr.mxu0 0.0
      %360 = vmatpush1.msra.mxu0 %v274
      %361 = vmatprep.subr.mxu0 0.0
      %362 = vmatpush1.msra.mxu0 %v275
      %363 = vmatprep.subr.mxu0 0.0
      %364 = vmatpush1.msra.mxu0 %v276
      %365 = vmatprep.subr.mxu0 0.0
      %366 = vmatpush1.msra.mxu0 %v277
      %367 = vmatprep.subr.mxu0 0.0
      %368 = vmatpush1.msra.mxu0 %v278
      %369 = vmatprep.subr.mxu0 0.0
      %370 = vmatpush1.msra.mxu0 %v279
      %371 = vmatprep.subr.mxu0 0.0
      %372 = vmatpush1.msra.mxu0 %v280
      %373 = vmatprep.subr.mxu0 0.0
      %374 = vmatpush1.msra.mxu0 %v281
      %375 = vmatprep.subr.mxu0 0.0
      %376 = vmatpush1.msra.mxu0 %v282
      %377 = vmatprep.subr.mxu0 0.0
      %378 = vmatpush1.msra.mxu0 %v283
      %379 = vmatprep.subr.mxu0 0.0
      %380 = vmatpush1.msra.mxu0 %v284
      %381 = vmatprep.subr.mxu0 0.0
      %382 = vmatpush1.msra.mxu0 %v285
      %383 = vmatprep.subr.mxu0 0.0
      %384 = vmatpush1.msra.mxu0 %v286
      %385 = vmatprep.subr.mxu0 0.0
      %386 = vmatpush1.msra.mxu0 %v287
      %387 = vmatprep.subr.mxu0 0.0
      %388 = vmatpush1.msra.mxu0 %v288
      %389 = vmatprep.subr.mxu0 0.0
      %390 = vmatpush1.msra.mxu0 %v289
      %391 = vmatprep.subr.mxu0 0.0
      %392 = vmatpush1.msra.mxu0 %v290
      %393 = vmatprep.subr.mxu0 0.0
      %394 = vmatpush1.msra.mxu0 %v291
      %395 = vmatprep.subr.mxu0 0.0
      %396 = vmatpush1.msra.mxu0 %v292
      %397 = vmatprep.mubr.f32.mxu0 %v330
      %398 = vmatmul.mubr.f32.gmra.mrb[0].mxu0 %v329
      %v399 = vpop.f32.mrb[0].mxu0
      %v400 = vadd.f32 0.0, %v399
      %v401 = vpop.f32.mrb[0].mxu0
      %402 = vdwg.mxu0
      %403 = vmatprep.subr.mxu0 0.0
      %404 = vmatpush1.msra.mxu0 %v293
      %405 = vmatprep.subr.mxu0 0.0
      %406 = vmatpush1.msra.mxu0 %v294
      %407 = vmatprep.subr.mxu0 0.0
      %408 = vmatpush1.msra.mxu0 %v295
      %409 = vmatprep.subr.mxu0 0.0
      %410 = vmatpush1.msra.mxu0 %v296
      %411 = vmatprep.subr.mxu0 0.0
      %412 = vmatpush1.msra.mxu0 %v297
      %413 = vmatprep.subr.mxu0 0.0
      %414 = vmatpush1.msra.mxu0 %v298
      %415 = vmatprep.subr.mxu0 0.0
      %416 = vmatpush1.msra.mxu0 %v299
      %417 = vmatprep.subr.mxu0 0.0
      %418 = vmatpush1.msra.mxu0 %v300
      %419 = vmatprep.subr.mxu0 0.0
      %420 = vmatpush1.msra.mxu0 %v301
      %421 = vmatprep.subr.mxu0 0.0
      %422 = vmatpush1.msra.mxu0 %v302
      %423 = vmatprep.subr.mxu0 0.0
      %424 = vmatpush1.msra.mxu0 %v303
      %425 = vmatprep.subr.mxu0 0.0
      %426 = vmatpush1.msra.mxu0 %v304
      %427 = vmatprep.subr.mxu0 0.0
      %428 = vmatpush1.msra.mxu0 %v305
      %429 = vmatprep.subr.mxu0 0.0
      %430 = vmatpush1.msra.mxu0 %v306
      %431 = vmatprep.subr.mxu0 0.0
      %432 = vmatpush1.msra.mxu0 %v307
      %433 = vmatprep.subr.mxu0 0.0
      %434 = vmatpush1.msra.mxu0 %v308
      %435 = vmatprep.subr.mxu0 0.0
      %436 = vmatpush1.msra.mxu0 %v309
      %437 = vmatprep.subr.mxu0 0.0
      %438 = vmatpush1.msra.mxu0 %v310
      %439 = vmatprep.subr.mxu0 0.0
      %440 = vmatpush1.msra.mxu0 %v311
      %441 = vmatprep.subr.mxu0 0.0
      %442 = vmatpush1.msra.mxu0 %v312
      %443 = vmatprep.subr.mxu0 0.0
      %444 = vmatpush1.msra.mxu0 %v313
      %445 = vmatprep.subr.mxu0 0.0
      %446 = vmatpush1.msra.mxu0 %v314
      %447 = vmatprep.subr.mxu0 0.0
      %448 = vmatpush1.msra.mxu0 %v315
      %449 = vmatprep.subr.mxu0 0.0
      %450 = vmatpush1.msra.mxu0 %v316
      %451 = vmatprep.subr.mxu0 0.0
      %452 = vmatpush1.msra.mxu0 %v317
      %453 = vmatprep.subr.mxu0 0.0
      %454 = vmatpush1.msra.mxu0 %v318
      %455 = vmatprep.subr.mxu0 0.0
      %456 = vmatpush1.msra.mxu0 %v319
      %457 = vmatprep.subr.mxu0 0.0
      %458 = vmatpush1.msra.mxu0 %v320
      %459 = vmatprep.subr.mxu0 0.0
      %460 = vmatpush1.msra.mxu0 %v321
      %461 = vmatprep.subr.mxu0 0.0
      %462 = vmatpush1.msra.mxu0 %v322
      %463 = vmatprep.subr.mxu0 0.0
      %464 = vmatpush1.msra.mxu0 %v323
      %465 = vmatprep.subr.mxu0 0.0
      %466 = vmatpush1.msra.mxu0 %v324
      %467 = vmatprep.mubr.f32.mxu0 %v332
      %468 = vmatmul.mubr.f32.gmra.mrb[0].mxu0 %v331
      %v469 = vpop.f32.mrb[0].mxu0
      %v470 = vadd.f32 %v400, %v469
      %v471 = vpop.f32.mrb[0].mxu0
      %472 = vdwg.mxu0
      %v473 = vmul.f32 %v253, %v253
      %v474 = vmul.f32 %v254, %v254
      %v475 = vmul.f32 %v255, %v255
      %v476 = vmul.f32 %v256, %v256
      %v477 = vmul.f32 %v257, %v257
      %v478 = vmul.f32 %v258, %v258
      %v479 = vmul.f32 %v259, %v259
      %v480 = vmul.f32 %v260, %v260
      %v481 = vadd.f32 %v473, %v477
      %v482 = vadd.f32 %v474, %v478
      %v483 = vadd.f32 %v475, %v479
      %v484 = vadd.f32 %v476, %v480
      %485 = vmatprep.subr.mxu0 0.0
      %486 = vmatpush1.msra.mxu0 %v261
      %487 = vmatprep.subr.mxu0 0.0
      %488 = vmatpush1.msra.mxu0 %v262
      %489 = vmatprep.subr.mxu0 0.0
      %490 = vmatpush1.msra.mxu0 %v263
      %491 = vmatprep.subr.mxu0 0.0
      %492 = vmatpush1.msra.mxu0 %v264
      %493 = vmatprep.subr.mxu0 0.0
      %494 = vmatpush1.msra.mxu0 %v265
      %495 = vmatprep.subr.mxu0 0.0
      %496 = vmatpush1.msra.mxu0 %v266
      %497 = vmatprep.subr.mxu0 0.0
      %498 = vmatpush1.msra.mxu0 %v267
      %499 = vmatprep.subr.mxu0 0.0
      %500 = vmatpush1.msra.mxu0 %v268
      %501 = vmatprep.subr.mxu0 0.0
      %502 = vmatpush1.msra.mxu0 %v269
      %503 = vmatprep.subr.mxu0 0.0
      %504 = vmatpush1.msra.mxu0 %v270
      %505 = vmatprep.subr.mxu0 0.0
      %506 = vmatpush1.msra.mxu0 %v271
      %507 = vmatprep.subr.mxu0 0.0
      %508 = vmatpush1.msra.mxu0 %v272
      %509 = vmatprep.subr.mxu0 0.0
      %510 = vmatpush1.msra.mxu0 %v273
      %511 = vmatprep.subr.mxu0 0.0
      %512 = vmatpush1.msra.mxu0 %v274
      %513 = vmatprep.subr.mxu0 0.0
      %514 = vmatpush1.msra.mxu0 %v275
      %515 = vmatprep.subr.mxu0 0.0
      %516 = vmatpush1.msra.mxu0 %v276
      %517 = vmatprep.subr.mxu0 0.0
      %518 = vmatpush1.msra.mxu0 %v277
      %519 = vmatprep.subr.mxu0 0.0
      %520 = vmatpush1.msra.mxu0 %v278
      %521 = vmatprep.subr.mxu0 0.0
      %522 = vmatpush1.msra.mxu0 %v279
      %523 = vmatprep.subr.mxu0 0.0
      %524 = vmatpush1.msra.mxu0 %v280
      %525 = vmatprep.subr.mxu0 0.0
      %526 = vmatpush1.msra.mxu0 %v281
      %527 = vmatprep.subr.mxu0 0.0
      %528 = vmatpush1.msra.mxu0 %v282
      %529 = vmatprep.subr.mxu0 0.0
      %530 = vmatpush1.msra.mxu0 %v283
      %531 = vmatprep.subr.mxu0 0.0
      %532 = vmatpush1.msra.mxu0 %v284
      %533 = vmatprep.subr.mxu0 0.0
      %534 = vmatpush1.msra.mxu0 %v285
      %535 = vmatprep.subr.mxu0 0.0
      %536 = vmatpush1.msra.mxu0 %v286
      %537 = vmatprep.subr.mxu0 0.0
      %538 = vmatpush1.msra.mxu0 %v287
      %539 = vmatprep.subr.mxu0 0.0
      %540 = vmatpush1.msra.mxu0 %v288
      %541 = vmatprep.subr.mxu0 0.0
      %542 = vmatpush1.msra.mxu0 %v289
      %543 = vmatprep.subr.mxu0 0.0
      %544 = vmatpush1.msra.mxu0 %v290
      %545 = vmatprep.subr.mxu0 0.0
      %546 = vmatpush1.msra.mxu0 %v291
      %547 = vmatprep.subr.mxu0 0.0
      %548 = vmatpush1.msra.mxu0 %v292
      %549 = vmatprep.mubr.f32.mxu0 %v482
      %550 = vmatmul.mubr.f32.gmra.mrb[0].mxu0 %v481
      %v551 = vpop.f32.mrb[0].mxu0
      %v552 = vadd.f32 0.0, %v551
      %v553 = vpop.f32.mrb[0].mxu0
      %554 = vdwg.mxu0
      %555 = vmatprep.subr.mxu0 0.0
      %556 = vmatpush1.msra.mxu0 %v293
      %557 = vmatprep.subr.mxu0 0.0
      %558 = vmatpush1.msra.mxu0 %v294
      %559 = vmatprep.subr.mxu0 0.0
      %560 = vmatpush1.msra.mxu0 %v295
      %561 = vmatprep.subr.mxu0 0.0
      %562 = vmatpush1.msra.mxu0 %v296
      %563 = vmatprep.subr.mxu0 0.0
      %564 = vmatpush1.msra.mxu0 %v297
      %565 = vmatprep.subr.mxu0 0.0
      %566 = vmatpush1.msra.mxu0 %v298
      %567 = vmatprep.subr.mxu0 0.0
      %568 = vmatpush1.msra.mxu0 %v299
      %569 = vmatprep.subr.mxu0 0.0
      %570 = vmatpush1.msra.mxu0 %v300
      %571 = vmatprep.subr.mxu0 0.0
      %572 = vmatpush1.msra.mxu0 %v301
      %573 = vmatprep.subr.mxu0 0.0
      %574 = vmatpush1.msra.mxu0 %v302
      %575 = vmatprep.subr.mxu0 0.0
      %576 = vmatpush1.msra.mxu0 %v303
      %577 = vmatprep.subr.mxu0 0.0
      %578 = vmatpush1.msra.mxu0 %v304
      %579 = vmatprep.subr.mxu0 0.0
      %580 = vmatpush1.msra.mxu0 %v305
      %581 = vmatprep.subr.mxu0 0.0
      %582 = vmatpush1.msra.mxu0 %v306
      %583 = vmatprep.subr.mxu0 0.0
      %584 = vmatpush1.msra.mxu0 %v307
      %585 = vmatprep.subr.mxu0 0.0
      %586 = vmatpush1.msra.mxu0 %v308
      %587 = vmatprep.subr.mxu0 0.0
      %588 = vmatpush1.msra.mxu0 %v309
      %589 = vmatprep.subr.mxu0 0.0
      %590 = vmatpush1.msra.mxu0 %v310
      %591 = vmatprep.subr.mxu0 0.0
      %592 = vmatpush1.msra.mxu0 %v311
      %593 = vmatprep.subr.mxu0 0.0
      %594 = vmatpush1.msra.mxu0 %v312
      %595 = vmatprep.subr.mxu0 0.0
      %596 = vmatpush1.msra.mxu0 %v313
      %597 = vmatprep.subr.mxu0 0.0
      %598 = vmatpush1.msra.mxu0 %v314
      %599 = vmatprep.subr.mxu0 0.0
      %600 = vmatpush1.msra.mxu0 %v315
      %601 = vmatprep.subr.mxu0 0.0
      %602 = vmatpush1.msra.mxu0 %v316
      %603 = vmatprep.subr.mxu0 0.0
      %604 = vmatpush1.msra.mxu0 %v317
      %605 = vmatprep.subr.mxu0 0.0
      %606 = vmatpush1.msra.mxu0 %v318
      %607 = vmatprep.subr.mxu0 0.0
      %608 = vmatpush1.msra.mxu0 %v319
      %609 = vmatprep.subr.mxu0 0.0
      %610 = vmatpush1.msra.mxu0 %v320
      %611 = vmatprep.subr.mxu0 0.0
      %612 = vmatpush1.msra.mxu0 %v321
      %613 = vmatprep.subr.mxu0 0.0
      %614 = vmatpush1.msra.mxu0 %v322
      %615 = vmatprep.subr.mxu0 0.0
      %616 = vmatpush1.msra.mxu0 %v323
      %617 = vmatprep.subr.mxu0 0.0
      %618 = vmatpush1.msra.mxu0 %v324
      %619 = vmatprep.mubr.f32.mxu0 %v484
      %620 = vmatmul.mubr.f32.gmra.mrb[0].mxu0 %v483
      %v621 = vpop.f32.mrb[0].mxu0
      %v622 = vadd.f32 %v552, %v621
      %v623 = vpop.f32.mrb[0].mxu0
      %624 = vdwg.mxu0
      %v625 = vmul.f32 %v470, 0.0078125
      %v626 = vmul.f32 %v622, 0.0078125
      %v627 = vmul.f32 %v625, %v625
      %v628 = vsub.f32 %v626, %v627
      %v629 = vmax.f32 %v628, 0.0
      %v630 = vadd.f32 %v629, 1e-05
      %v631 = vrsqrt.pop %v630
      %vm632 = vcmask 64512
      %v634 = vsel %vm632, %v625, 0
      %636 = vmatprep.subr.mxu0 %v326
      %637 = vmatpush1.msra.mxu0 %v325
      %638 = vmatprep.subr.mxu0 0.0
      %639 = vmatpush1.msra.mxu0 0.0
      %640 = vmatprep.subr.mxu0 0.0
      %641 = vmatpush1.msra.mxu0 0.0
      %642 = vmatprep.subr.mxu0 0.0
      %643 = vmatpush1.msra.mxu0 0.0
      %644 = vmatprep.subr.mxu0 0.0
      %645 = vmatpush1.msra.mxu0 0.0
      %646 = vmatprep.subr.mxu0 0.0
      %647 = vmatpush1.msra.mxu0 0.0
      %648 = vmatprep.subr.mxu0 0.0
      %649 = vmatpush1.msra.mxu0 0.0
      %650 = vmatprep.subr.mxu0 0.0
      %651 = vmatpush1.msra.mxu0 0.0
      %652 = vmatprep.subr.mxu0 0.0
      %653 = vmatpush1.msra.mxu0 0.0
      %654 = vmatprep.subr.mxu0 0.0
      %655 = vmatpush1.msra.mxu0 0.0
      %656 = vmatprep.subr.mxu0 0.0
      %657 = vmatpush1.msra.mxu0 0.0
      %658 = vmatprep.subr.mxu0 0.0
      %659 = vmatpush1.msra.mxu0 0.0
      %660 = vmatprep.subr.mxu0 0.0
      %661 = vmatpush1.msra.mxu0 0.0
      %662 = vmatprep.subr.mxu0 0.0
      %663 = vmatpush1.msra.mxu0 0.0
      %664 = vmatprep.subr.mxu0 0.0
      %665 = vmatpush1.msra.mxu0 0.0
      %666 = vmatprep.subr.mxu0 0.0
      %667 = vmatpush1.msra.mxu0 0.0
      %668 = vmatprep.subr.mxu0 0.0
      %669 = vmatpush1.msra.mxu0 0.0
      %670 = vmatprep.subr.mxu0 0.0
      %671 = vmatpush1.msra.mxu0 0.0
      %672 = vmatprep.subr.mxu0 0.0
      %673 = vmatpush1.msra.mxu0 0.0
      %674 = vmatprep.subr.mxu0 0.0
      %675 = vmatpush1.msra.mxu0 0.0
      %676 = vmatprep.subr.mxu0 0.0
      %677 = vmatpush1.msra.mxu0 0.0
      %678 = vmatprep.subr.mxu0 0.0
      %679 = vmatpush1.msra.mxu0 0.0
      %680 = vmatprep.subr.mxu0 0.0
      %681 = vmatpush1.msra.mxu0 0.0
      %682 = vmatprep.subr.mxu0 0.0
      %683 = vmatpush1.msra.mxu0 0.0
      %684 = vmatprep.subr.mxu0 0.0
      %685 = vmatpush1.msra.mxu0 0.0
      %686 = vmatprep.subr.mxu0 0.0
      %687 = vmatpush1.msra.mxu0 0.0
      %688 = vmatprep.subr.mxu0 0.0
      %689 = vmatpush1.msra.mxu0 0.0
      %690 = vmatprep.subr.mxu0 0.0
      %691 = vmatpush1.msra.mxu0 0.0
      %692 = vmatprep.subr.mxu0 0.0
      %693 = vmatpush1.msra.mxu0 0.0
      %694 = vmatprep.subr.mxu0 0.0
      %695 = vmatpush1.msra.mxu0 0.0
      %696 = vmatprep.subr.mxu0 0.0
      %697 = vmatpush1.msra.mxu0 0.0
      %698 = vmatprep.subr.mxu0 0.0
      %699 = vmatpush1.msra.mxu0 0.0
      %700 = vmatprep.mubr.f32.mxu0 0.0
      %701 = vmatmul.mubr.f32.gmra.mrb[0].mxu0 %v634
      %v702 = vpop.f32.mrb[0].mxu0
      %v703 = vadd.f32 0.0, %v702
      %v704 = vpop.f32.mrb[0].mxu0
      %v705 = vadd.f32 0.0, %v704
      %706 = vdwg.mxu0
      %707 = vmatprep.subr.mxu0 %v328
      %708 = vmatpush1.msra.mxu0 %v327
      %709 = vmatprep.subr.mxu0 0.0
      %710 = vmatpush1.msra.mxu0 0.0
      %711 = vmatprep.subr.mxu0 0.0
      %712 = vmatpush1.msra.mxu0 0.0
      %713 = vmatprep.subr.mxu0 0.0
      %714 = vmatpush1.msra.mxu0 0.0
      %715 = vmatprep.subr.mxu0 0.0
      %716 = vmatpush1.msra.mxu0 0.0
      %717 = vmatprep.subr.mxu0 0.0
      %718 = vmatpush1.msra.mxu0 0.0
      %719 = vmatprep.subr.mxu0 0.0
      %720 = vmatpush1.msra.mxu0 0.0
      %721 = vmatprep.subr.mxu0 0.0
      %722 = vmatpush1.msra.mxu0 0.0
      %723 = vmatprep.subr.mxu0 0.0
      %724 = vmatpush1.msra.mxu0 0.0
      %725 = vmatprep.subr.mxu0 0.0
      %726 = vmatpush1.msra.mxu0 0.0
      %727 = vmatprep.subr.mxu0 0.0
      %728 = vmatpush1.msra.mxu0 0.0
      %729 = vmatprep.subr.mxu0 0.0
      %730 = vmatpush1.msra.mxu0 0.0
      %731 = vmatprep.subr.mxu0 0.0
      %732 = vmatpush1.msra.mxu0 0.0
      %733 = vmatprep.subr.mxu0 0.0
      %734 = vmatpush1.msra.mxu0 0.0
      %735 = vmatprep.subr.mxu0 0.0
      %736 = vmatpush1.msra.mxu0 0.0
      %737 = vmatprep.subr.mxu0 0.0
      %738 = vmatpush1.msra.mxu0 0.0
      %739 = vmatprep.subr.mxu0 0.0
      %740 = vmatpush1.msra.mxu0 0.0
      %741 = vmatprep.subr.mxu0 0.0
      %742 = vmatpush1.msra.mxu0 0.0
      %743 = vmatprep.subr.mxu0 0.0
      %744 = vmatpush1.msra.mxu0 0.0
      %745 = vmatprep.subr.mxu0 0.0
      %746 = vmatpush1.msra.mxu0 0.0
      %747 = vmatprep.subr.mxu0 0.0
      %748 = vmatpush1.msra.mxu0 0.0
      %749 = vmatprep.subr.mxu0 0.0
      %750 = vmatpush1.msra.mxu0 0.0
      %751 = vmatprep.subr.mxu0 0.0
      %752 = vmatpush1.msra.mxu0 0.0
      %753 = vmatprep.subr.mxu0 0.0
      %754 = vmatpush1.msra.mxu0 0.0
      %755 = vmatprep.subr.mxu0 0.0
      %756 = vmatpush1.msra.mxu0 0.0
      %757 = vmatprep.subr.mxu0 0.0
      %758 = vmatpush1.msra.mxu0 0.0
      %759 = vmatprep.subr.mxu0 0.0
      %760 = vmatpush1.msra.mxu0 0.0
      %761 = vmatprep.subr.mxu0 0.0
      %762 = vmatpush1.msra.mxu0 0.0
      %763 = vmatprep.subr.mxu0 0.0
      %764 = vmatpush1.msra.mxu0 0.0
      %765 = vmatprep.subr.mxu0 0.0
      %766 = vmatpush1.msra.mxu0 0.0
      %767 = vmatprep.subr.mxu0 0.0
      %768 = vmatpush1.msra.mxu0 0.0
      %769 = vmatprep.subr.mxu0 0.0
      %770 = vmatpush1.msra.mxu0 0.0
      %771 = vmatprep.mubr.f32.mxu0 0.0
      %772 = vmatmul.mubr.f32.gmra.mrb[0].mxu0 %v634
      %v773 = vpop.f32.mrb[0].mxu0
      %v774 = vadd.f32 0.0, %v773
      %v775 = vpop.f32.mrb[0].mxu0
      %v776 = vadd.f32 0.0, %v775
      %777 = vdwg.mxu0
      %v779 = vsel %vm632, %v631, 0
      %781 = vmatprep.subr.mxu0 %v326
      %782 = vmatpush1.msra.mxu0 %v325
      %783 = vmatprep.subr.mxu0 0.0
      %784 = vmatpush1.msra.mxu0 0.0
      %785 = vmatprep.subr.mxu0 0.0
      %786 = vmatpush1.msra.mxu0 0.0
      %787 = vmatprep.subr.mxu0 0.0
      %788 = vmatpush1.msra.mxu0 0.0
      %789 = vmatprep.subr.mxu0 0.0
      %790 = vmatpush1.msra.mxu0 0.0
      %791 = vmatprep.subr.mxu0 0.0
      %792 = vmatpush1.msra.mxu0 0.0
      %793 = vmatprep.subr.mxu0 0.0
      %794 = vmatpush1.msra.mxu0 0.0
      %795 = vmatprep.subr.mxu0 0.0
      %796 = vmatpush1.msra.mxu0 0.0
      %797 = vmatprep.subr.mxu0 0.0
      %798 = vmatpush1.msra.mxu0 0.0
      %799 = vmatprep.subr.mxu0 0.0
      %800 = vmatpush1.msra.mxu0 0.0
      %801 = vmatprep.subr.mxu0 0.0
      %802 = vmatpush1.msra.mxu0 0.0
      %803 = vmatprep.subr.mxu0 0.0
      %804 = vmatpush1.msra.mxu0 0.0
      %805 = vmatprep.subr.mxu0 0.0
      %806 = vmatpush1.msra.mxu0 0.0
      %807 = vmatprep.subr.mxu0 0.0
      %808 = vmatpush1.msra.mxu0 0.0
      %809 = vmatprep.subr.mxu0 0.0
      %810 = vmatpush1.msra.mxu0 0.0
      %811 = vmatprep.subr.mxu0 0.0
      %812 = vmatpush1.msra.mxu0 0.0
      %813 = vmatprep.subr.mxu0 0.0
      %814 = vmatpush1.msra.mxu0 0.0
      %815 = vmatprep.subr.mxu0 0.0
      %816 = vmatpush1.msra.mxu0 0.0
      %817 = vmatprep.subr.mxu0 0.0
      %818 = vmatpush1.msra.mxu0 0.0
      %819 = vmatprep.subr.mxu0 0.0
      %820 = vmatpush1.msra.mxu0 0.0
      %821 = vmatprep.subr.mxu0 0.0
      %822 = vmatpush1.msra.mxu0 0.0
      %823 = vmatprep.subr.mxu0 0.0
      %824 = vmatpush1.msra.mxu0 0.0
      %825 = vmatprep.subr.mxu0 0.0
      %826 = vmatpush1.msra.mxu0 0.0
      %827 = vmatprep.subr.mxu0 0.0
      %828 = vmatpush1.msra.mxu0 0.0
      %829 = vmatprep.subr.mxu0 0.0
      %830 = vmatpush1.msra.mxu0 0.0
      %831 = vmatprep.subr.mxu0 0.0
      %832 = vmatpush1.msra.mxu0 0.0
      %833 = vmatprep.subr.mxu0 0.0
      %834 = vmatpush1.msra.mxu0 0.0
      %835 = vmatprep.subr.mxu0 0.0
      %836 = vmatpush1.msra.mxu0 0.0
      %837 = vmatprep.subr.mxu0 0.0
      %838 = vmatpush1.msra.mxu0 0.0
      %839 = vmatprep.subr.mxu0 0.0
      %840 = vmatpush1.msra.mxu0 0.0
      %841 = vmatprep.subr.mxu0 0.0
      %842 = vmatpush1.msra.mxu0 0.0
      %843 = vmatprep.subr.mxu0 0.0
      %844 = vmatpush1.msra.mxu0 0.0
      %845 = vmatprep.mubr.f32.mxu0 0.0
      %846 = vmatmul.mubr.f32.gmra.mrb[0].mxu0 %v779
      %v847 = vpop.f32.mrb[0].mxu0
      %v848 = vadd.f32 0.0, %v847
      %v849 = vpop.f32.mrb[0].mxu0
      %v850 = vadd.f32 0.0, %v849
      %851 = vdwg.mxu0
      %852 = vmatprep.subr.mxu0 %v328
      %853 = vmatpush1.msra.mxu0 %v327
      %854 = vmatprep.subr.mxu0 0.0
      %855 = vmatpush1.msra.mxu0 0.0
      %856 = vmatprep.subr.mxu0 0.0
      %857 = vmatpush1.msra.mxu0 0.0
      %858 = vmatprep.subr.mxu0 0.0
      %859 = vmatpush1.msra.mxu0 0.0
      %860 = vmatprep.subr.mxu0 0.0
      %861 = vmatpush1.msra.mxu0 0.0
      %862 = vmatprep.subr.mxu0 0.0
      %863 = vmatpush1.msra.mxu0 0.0
      %864 = vmatprep.subr.mxu0 0.0
      %865 = vmatpush1.msra.mxu0 0.0
      %866 = vmatprep.subr.mxu0 0.0
      %867 = vmatpush1.msra.mxu0 0.0
      %868 = vmatprep.subr.mxu0 0.0
      %869 = vmatpush1.msra.mxu0 0.0
      %870 = vmatprep.subr.mxu0 0.0
      %871 = vmatpush1.msra.mxu0 0.0
      %872 = vmatprep.subr.mxu0 0.0
      %873 = vmatpush1.msra.mxu0 0.0
      %874 = vmatprep.subr.mxu0 0.0
      %875 = vmatpush1.msra.mxu0 0.0
      %876 = vmatprep.subr.mxu0 0.0
      %877 = vmatpush1.msra.mxu0 0.0
      %878 = vmatprep.subr.mxu0 0.0
      %879 = vmatpush1.msra.mxu0 0.0
      %880 = vmatprep.subr.mxu0 0.0
      %881 = vmatpush1.msra.mxu0 0.0
      %882 = vmatprep.subr.mxu0 0.0
      %883 = vmatpush1.msra.mxu0 0.0
      %884 = vmatprep.subr.mxu0 0.0
      %885 = vmatpush1.msra.mxu0 0.0
      %886 = vmatprep.subr.mxu0 0.0
      %887 = vmatpush1.msra.mxu0 0.0
      %888 = vmatprep.subr.mxu0 0.0
      %889 = vmatpush1.msra.mxu0 0.0
      %890 = vmatprep.subr.mxu0 0.0
      %891 = vmatpush1.msra.mxu0 0.0
      %892 = vmatprep.subr.mxu0 0.0
      %893 = vmatpush1.msra.mxu0 0.0
      %894 = vmatprep.subr.mxu0 0.0
      %895 = vmatpush1.msra.mxu0 0.0
      %896 = vmatprep.subr.mxu0 0.0
      %897 = vmatpush1.msra.mxu0 0.0
      %898 = vmatprep.subr.mxu0 0.0
      %899 = vmatpush1.msra.mxu0 0.0
      %900 = vmatprep.subr.mxu0 0.0
      %901 = vmatpush1.msra.mxu0 0.0
      %902 = vmatprep.subr.mxu0 0.0
      %903 = vmatpush1.msra.mxu0 0.0
      %904 = vmatprep.subr.mxu0 0.0
      %905 = vmatpush1.msra.mxu0 0.0
      %906 = vmatprep.subr.mxu0 0.0
      %907 = vmatpush1.msra.mxu0 0.0
      %908 = vmatprep.subr.mxu0 0.0
      %909 = vmatpush1.msra.mxu0 0.0
      %910 = vmatprep.subr.mxu0 0.0
      %911 = vmatpush1.msra.mxu0 0.0
      %912 = vmatprep.subr.mxu0 0.0
      %913 = vmatpush1.msra.mxu0 0.0
      %914 = vmatprep.subr.mxu0 0.0
      %915 = vmatpush1.msra.mxu0 0.0
      %916 = vmatprep.mubr.f32.mxu0 0.0
      %917 = vmatmul.mubr.f32.gmra.mrb[0].mxu0 %v779
      %v918 = vpop.f32.mrb[0].mxu0
      %v919 = vadd.f32 0.0, %v918
      %v920 = vpop.f32.mrb[0].mxu0
      %v921 = vadd.f32 0.0, %v920
      %922 = vdwg.mxu0
      %v923 = vsub.f32 %v253, %v703
      %v924 = vsub.f32 %v254, %v705
      %v925 = vsub.f32 %v255, %v774
      %v926 = vsub.f32 %v256, %v776
      %v927 = vmul.f32 %v923, %v848
      %v928 = vmul.f32 %v924, %v850
      %v929 = vmul.f32 %v925, %v919
      %v930 = vmul.f32 %v926, %v921
      %v931 = vpack.c.bf16 %v927, %v927
      %v932 = vpack.c.bf16 %v928, %v928
      %v933 = vpack.c.bf16 %v929, %v929
      %v934 = vpack.c.bf16 %v930, %v930
      %v935 = vsub.f32 %v257, %v703
      %v936 = vsub.f32 %v258, %v705
      %v937 = vsub.f32 %v259, %v774
      %v938 = vsub.f32 %v260, %v776
      %v939 = vmul.f32 %v935, %v848
      %v940 = vmul.f32 %v936, %v850
      %v941 = vmul.f32 %v937, %v919
      %v942 = vmul.f32 %v938, %v921
      %v943 = vpack.c.bf16 %v939, %v939
      %v944 = vpack.c.bf16 %v940, %v940
      %v945 = vpack.c.bf16 %v941, %v941
      %v946 = vpack.c.bf16 %v942, %v942
      %v947 = vld [vmem:[%s1] sm:$0xf]
      %v948 = vld [vmem:[%s1 + $0x4] sm:$0xf]
      %v949 = vld [vmem:[%s1 + $0x8] sm:$0xf]
      %v950 = vld [vmem:[%s1 + $0xc] sm:$0xf]
      %v951 = vld [vmem:[%s1 + $0x10] sm:$0xf]
      %v952 = vld [vmem:[%s1 + $0x14] sm:$0xf]
      %v953 = vld [vmem:[%s1 + $0x18] sm:$0xf]
      %v954 = vld [vmem:[%s1 + $0x1c] sm:$0xf]
      %v955 = vld [vmem:[%s1 + $0x20] sm:$0xf]
      %v956 = vld [vmem:[%s1 + $0x24] sm:$0xf]
      %v957 = vld [vmem:[%s1 + $0x28] sm:$0xf]
      %v958 = vld [vmem:[%s1 + $0x2c] sm:$0xf]
      %v959 = vld [vmem:[%s1 + $0x30] sm:$0xf]
      %v960 = vld [vmem:[%s1 + $0x34] sm:$0xf]
      %v961 = vld [vmem:[%s1 + $0x38] sm:$0xf]
      %v962 = vld [vmem:[%s1 + $0x3c] sm:$0xf]
      %v963 = vld [vmem:[%s2] sm:$0xf]
      %v964 = vld [vmem:[%s2 + $0x4] sm:$0xf]
      %v965 = vld [vmem:[%s2 + $0x8] sm:$0xf]
      %v966 = vld [vmem:[%s2 + $0xc] sm:$0xf]
      %v967 = vld [vmem:[%s2 + $0x10] sm:$0xf]
      %v968 = vld [vmem:[%s2 + $0x14] sm:$0xf]
      %v969 = vld [vmem:[%s2 + $0x18] sm:$0xf]
      %v970 = vld [vmem:[%s2 + $0x1c] sm:$0xf]
      %v971 = vld [vmem:[%s2 + $0x20] sm:$0xf]
      %v972 = vld [vmem:[%s2 + $0x24] sm:$0xf]
      %v973 = vld [vmem:[%s2 + $0x28] sm:$0xf]
      %v974 = vld [vmem:[%s2 + $0x2c] sm:$0xf]
      %v975 = vld [vmem:[%s2 + $0x30] sm:$0xf]
      %v976 = vld [vmem:[%s2 + $0x34] sm:$0xf]
      %v977 = vld [vmem:[%s2 + $0x38] sm:$0xf]
      %v978 = vld [vmem:[%s2 + $0x3c] sm:$0xf]
      %v979 = vld [vmem:[%s5] sm:$0x1]
      %v996 = vunpack.c.l.b16 %v963
      %v997 = vunpack.c.l.b16 %v964
      %v998 = vunpack.c.l.b16 %v965
      %v999 = vunpack.c.l.b16 %v966
      %v1000 = vunpack.c.l.b16 %v967
      %v1001 = vunpack.c.l.b16 %v968
      %v1002 = vunpack.c.l.b16 %v969
      %v1003 = vunpack.c.l.b16 %v970
      %v1004 = vunpack.c.l.b16 %v971
      %v1005 = vunpack.c.l.b16 %v972
      %v1006 = vunpack.c.l.b16 %v973
      %v1007 = vunpack.c.l.b16 %v974
      %v1008 = vunpack.c.l.b16 %v975
      %v1009 = vunpack.c.l.b16 %v976
      %v1010 = vunpack.c.l.b16 %v977
      %v1011 = vunpack.c.l.b16 %v978
      %v1012 = vpack.c.b16 %v997, %v996
      %v1013 = vpack.c.b16 %v999, %v998
      %v1014 = vpack.c.b16 %v1001, %v1000
      %v1015 = vpack.c.b16 %v1003, %v1002
      %v1016 = vpack.c.b16 %v1005, %v1004
      %v1017 = vpack.c.b16 %v1007, %v1006
      %v1018 = vpack.c.b16 %v1009, %v1008
      %v1019 = vpack.c.b16 %v1011, %v1010
      %1028 = vmatprep.subr.bf16.mxu0 0
      %1029 = vmatpush1.bf16.msra.mxu0 %v1012
      %1030 = vmatprep.subr.bf16.mxu0 0
      %1031 = vmatpush1.bf16.msra.mxu0 %v1013
      %1032 = vmatprep.subr.bf16.mxu0 0
      %1033 = vmatpush1.bf16.msra.mxu0 %v1014
      %1034 = vmatprep.subr.bf16.mxu0 0
      %1035 = vmatpush1.bf16.msra.mxu0 %v1015
      %1036 = vmatprep.subr.bf16.mxu0 0
      %1037 = vmatpush1.bf16.msra.mxu0 %v1016
      %1038 = vmatprep.subr.bf16.mxu0 0
      %1039 = vmatpush1.bf16.msra.mxu0 %v1017
      %1040 = vmatprep.subr.bf16.mxu0 0
      %1041 = vmatpush1.bf16.msra.mxu0 %v1018
      %1042 = vmatprep.subr.bf16.mxu0 0
      %1043 = vmatpush1.bf16.msra.mxu0 %v1019
      %1044 = vmatprep.subr.bf16.mxu0 0
      %1045 = vmatpush1.bf16.msra.mxu0 0
      %1046 = vmatprep.subr.bf16.mxu0 0
      %1047 = vmatpush1.bf16.msra.mxu0 0
      %1048 = vmatprep.subr.bf16.mxu0 0
      %1049 = vmatpush1.bf16.msra.mxu0 0
      %1050 = vmatprep.subr.bf16.mxu0 0
      %1051 = vmatpush1.bf16.msra.mxu0 0
      %1052 = vmatprep.subr.bf16.mxu0 0
      %1053 = vmatpush1.bf16.msra.mxu0 0
      %1054 = vmatprep.subr.bf16.mxu0 0
      %1055 = vmatpush1.bf16.msra.mxu0 0
      %1056 = vmatprep.subr.bf16.mxu0 0
      %1057 = vmatpush1.bf16.msra.mxu0 0
      %1058 = vmatprep.subr.bf16.mxu0 0
      %1059 = vmatpush1.bf16.msra.mxu0 0
      %1060 = vmatprep.mubr.bf16.mxu0 0
      %1061 = vmatmul.mubr.bf16.gmra.mrb[0].mxu0 %v943
      %v1062 = vpop.f32.mrb[0].mxu0
      %v1063 = vadd.f32 0.0, %v1062
      %v1064 = vpop.f32.mrb[0].mxu0
      %v1065 = vpop.f32.mrb[0].mxu0
      %v1066 = vpop.f32.mrb[0].mxu0
      %1067 = vdwg.mxu0
      %v1084 = vunpack.c.l.b16 %v947
      %v1085 = vunpack.c.l.b16 %v948
      %v1086 = vunpack.c.l.b16 %v949
      %v1087 = vunpack.c.l.b16 %v950
      %v1088 = vunpack.c.l.b16 %v951
      %v1089 = vunpack.c.l.b16 %v952
      %v1090 = vunpack.c.l.b16 %v953
      %v1091 = vunpack.c.l.b16 %v954
      %v1092 = vunpack.c.l.b16 %v955
      %v1093 = vunpack.c.l.b16 %v956
      %v1094 = vunpack.c.l.b16 %v957
      %v1095 = vunpack.c.l.b16 %v958
      %v1096 = vunpack.c.l.b16 %v959
      %v1097 = vunpack.c.l.b16 %v960
      %v1098 = vunpack.c.l.b16 %v961
      %v1099 = vunpack.c.l.b16 %v962
      %v1100 = vpack.c.b16 %v1085, %v1084
      %v1101 = vpack.c.b16 %v1087, %v1086
      %v1102 = vpack.c.b16 %v1089, %v1088
      %v1103 = vpack.c.b16 %v1091, %v1090
      %v1104 = vpack.c.b16 %v1093, %v1092
      %v1105 = vpack.c.b16 %v1095, %v1094
      %v1106 = vpack.c.b16 %v1097, %v1096
      %v1107 = vpack.c.b16 %v1099, %v1098
      %1116 = vmatprep.subr.bf16.mxu0 0
      %1117 = vmatpush1.bf16.msra.mxu0 %v1100
      %1118 = vmatprep.subr.bf16.mxu0 0
      %1119 = vmatpush1.bf16.msra.mxu0 %v1101
      %1120 = vmatprep.subr.bf16.mxu0 0
      %1121 = vmatpush1.bf16.msra.mxu0 %v1102
      %1122 = vmatprep.subr.bf16.mxu0 0
      %1123 = vmatpush1.bf16.msra.mxu0 %v1103
      %1124 = vmatprep.subr.bf16.mxu0 0
      %1125 = vmatpush1.bf16.msra.mxu0 %v1104
      %1126 = vmatprep.subr.bf16.mxu0 0
      %1127 = vmatpush1.bf16.msra.mxu0 %v1105
      %1128 = vmatprep.subr.bf16.mxu0 0
      %1129 = vmatpush1.bf16.msra.mxu0 %v1106
      %1130 = vmatprep.subr.bf16.mxu0 0
      %1131 = vmatpush1.bf16.msra.mxu0 %v1107
      %1132 = vmatprep.subr.bf16.mxu0 0
      %1133 = vmatpush1.bf16.msra.mxu0 0
      %1134 = vmatprep.subr.bf16.mxu0 0
      %1135 = vmatpush1.bf16.msra.mxu0 0
      %1136 = vmatprep.subr.bf16.mxu0 0
      %1137 = vmatpush1.bf16.msra.mxu0 0
      %1138 = vmatprep.subr.bf16.mxu0 0
      %1139 = vmatpush1.bf16.msra.mxu0 0
      %1140 = vmatprep.subr.bf16.mxu0 0
      %1141 = vmatpush1.bf16.msra.mxu0 0
      %1142 = vmatprep.subr.bf16.mxu0 0
      %1143 = vmatpush1.bf16.msra.mxu0 0
      %1144 = vmatprep.subr.bf16.mxu0 0
      %1145 = vmatpush1.bf16.msra.mxu0 0
      %1146 = vmatprep.subr.bf16.mxu0 0
      %1147 = vmatpush1.bf16.msra.mxu0 0
      %1148 = vmatprep.mubr.bf16.mxu0 0
      %1149 = vmatmul.mubr.bf16.gmra.mrb[0].mxu0 %v931
      %v1150 = vpop.f32.mrb[0].mxu0
      %v1151 = vadd.f32 %v1063, %v1150
      %v1152 = vpop.f32.mrb[0].mxu0
      %v1153 = vpop.f32.mrb[0].mxu0
      %v1154 = vpop.f32.mrb[0].mxu0
      %1155 = vdwg.mxu0
      %v1157 = vlaneseq
      %v1158 = vshrl.u32 %v1157, 7
      %v1159 = vsub.s32 0, %v1158
      %v1160 = vrot.slane %v979, %v1159
      %v1162 = vadd.f32 %v1151, %v1160
      %1163 = vst [vmem:[%s251] sm:$0xff] %v1162
      %1164 = vmatprep.subr.bf16.mxu0 0
      %1165 = vmatpush1.bf16.msra.mxu0 %v1012
      %1166 = vmatprep.subr.bf16.mxu0 0
      %1167 = vmatpush1.bf16.msra.mxu0 %v1013
      %1168 = vmatprep.subr.bf16.mxu0 0
      %1169 = vmatpush1.bf16.msra.mxu0 %v1014
      %1170 = vmatprep.subr.bf16.mxu0 0
      %1171 = vmatpush1.bf16.msra.mxu0 %v1015
      %1172 = vmatprep.subr.bf16.mxu0 0
      %1173 = vmatpush1.bf16.msra.mxu0 %v1016
      %1174 = vmatprep.subr.bf16.mxu0 0
      %1175 = vmatpush1.bf16.msra.mxu0 %v1017
      %1176 = vmatprep.subr.bf16.mxu0 0
      %1177 = vmatpush1.bf16.msra.mxu0 %v1018
      %1178 = vmatprep.subr.bf16.mxu0 0
      %1179 = vmatpush1.bf16.msra.mxu0 %v1019
      %1180 = vmatprep.subr.bf16.mxu0 0
      %1181 = vmatpush1.bf16.msra.mxu0 0
      %1182 = vmatprep.subr.bf16.mxu0 0
      %1183 = vmatpush1.bf16.msra.mxu0 0
      %1184 = vmatprep.subr.bf16.mxu0 0
      %1185 = vmatpush1.bf16.msra.mxu0 0
      %1186 = vmatprep.subr.bf16.mxu0 0
      %1187 = vmatpush1.bf16.msra.mxu0 0
      %1188 = vmatprep.subr.bf16.mxu0 0
      %1189 = vmatpush1.bf16.msra.mxu0 0
      %1190 = vmatprep.subr.bf16.mxu0 0
      %1191 = vmatpush1.bf16.msra.mxu0 0
      %1192 = vmatprep.subr.bf16.mxu0 0
      %1193 = vmatpush1.bf16.msra.mxu0 0
      %1194 = vmatprep.subr.bf16.mxu0 0
      %1195 = vmatpush1.bf16.msra.mxu0 0
      %1196 = vmatprep.mubr.bf16.mxu0 0
      %1197 = vmatmul.mubr.bf16.gmra.mrb[0].mxu0 %v944
      %v1198 = vpop.f32.mrb[0].mxu0
      %v1199 = vadd.f32 0.0, %v1198
      %v1200 = vpop.f32.mrb[0].mxu0
      %v1201 = vpop.f32.mrb[0].mxu0
      %v1202 = vpop.f32.mrb[0].mxu0
      %1203 = vdwg.mxu0
      %1204 = vmatprep.subr.bf16.mxu0 0
      %1205 = vmatpush1.bf16.msra.mxu0 %v1100
      %1206 = vmatprep.subr.bf16.mxu0 0
      %1207 = vmatpush1.bf16.msra.mxu0 %v1101
      %1208 = vmatprep.subr.bf16.mxu0 0
      %1209 = vmatpush1.bf16.msra.mxu0 %v1102
      %1210 = vmatprep.subr.bf16.mxu0 0
      %1211 = vmatpush1.bf16.msra.mxu0 %v1103
      %1212 = vmatprep.subr.bf16.mxu0 0
      %1213 = vmatpush1.bf16.msra.mxu0 %v1104
      %1214 = vmatprep.subr.bf16.mxu0 0
      %1215 = vmatpush1.bf16.msra.mxu0 %v1105
      %1216 = vmatprep.subr.bf16.mxu0 0
      %1217 = vmatpush1.bf16.msra.mxu0 %v1106
      %1218 = vmatprep.subr.bf16.mxu0 0
      %1219 = vmatpush1.bf16.msra.mxu0 %v1107
      %1220 = vmatprep.subr.bf16.mxu0 0
      %1221 = vmatpush1.bf16.msra.mxu0 0
      %1222 = vmatprep.subr.bf16.mxu0 0
      %1223 = vmatpush1.bf16.msra.mxu0 0
      %1224 = vmatprep.subr.bf16.mxu0 0
      %1225 = vmatpush1.bf16.msra.mxu0 0
      %1226 = vmatprep.subr.bf16.mxu0 0
      %1227 = vmatpush1.bf16.msra.mxu0 0
      %1228 = vmatprep.subr.bf16.mxu0 0
      %1229 = vmatpush1.bf16.msra.mxu0 0
      %1230 = vmatprep.subr.bf16.mxu0 0
      %1231 = vmatpush1.bf16.msra.mxu0 0
      %1232 = vmatprep.subr.bf16.mxu0 0
      %1233 = vmatpush1.bf16.msra.mxu0 0
      %1234 = vmatprep.subr.bf16.mxu0 0
      %1235 = vmatpush1.bf16.msra.mxu0 0
      %1236 = vmatprep.mubr.bf16.mxu0 0
      %1237 = vmatmul.mubr.bf16.gmra.mrb[0].mxu0 %v932
      %v1238 = vpop.f32.mrb[0].mxu0
      %v1239 = vadd.f32 %v1199, %v1238
      %v1240 = vpop.f32.mrb[0].mxu0
      %v1241 = vpop.f32.mrb[0].mxu0
      %v1242 = vpop.f32.mrb[0].mxu0
      %1243 = vdwg.mxu0
      %v1244 = vadd.f32 %v1239, %v1160
      %1245 = vst [vmem:[%s251 + $0x8] sm:$0xff] %v1244
      %1246 = vmatprep.subr.bf16.mxu0 0
      %1247 = vmatpush1.bf16.msra.mxu0 %v1012
      %1248 = vmatprep.subr.bf16.mxu0 0
      %1249 = vmatpush1.bf16.msra.mxu0 %v1013
      %1250 = vmatprep.subr.bf16.mxu0 0
      %1251 = vmatpush1.bf16.msra.mxu0 %v1014
      %1252 = vmatprep.subr.bf16.mxu0 0
      %1253 = vmatpush1.bf16.msra.mxu0 %v1015
      %1254 = vmatprep.subr.bf16.mxu0 0
      %1255 = vmatpush1.bf16.msra.mxu0 %v1016
      %1256 = vmatprep.subr.bf16.mxu0 0
      %1257 = vmatpush1.bf16.msra.mxu0 %v1017
      %1258 = vmatprep.subr.bf16.mxu0 0
      %1259 = vmatpush1.bf16.msra.mxu0 %v1018
      %1260 = vmatprep.subr.bf16.mxu0 0
      %1261 = vmatpush1.bf16.msra.mxu0 %v1019
      %1262 = vmatprep.subr.bf16.mxu0 0
      %1263 = vmatpush1.bf16.msra.mxu0 0
      %1264 = vmatprep.subr.bf16.mxu0 0
      %1265 = vmatpush1.bf16.msra.mxu0 0
      %1266 = vmatprep.subr.bf16.mxu0 0
      %1267 = vmatpush1.bf16.msra.mxu0 0
      %1268 = vmatprep.subr.bf16.mxu0 0
      %1269 = vmatpush1.bf16.msra.mxu0 0
      %1270 = vmatprep.subr.bf16.mxu0 0
      %1271 = vmatpush1.bf16.msra.mxu0 0
      %1272 = vmatprep.subr.bf16.mxu0 0
      %1273 = vmatpush1.bf16.msra.mxu0 0
      %1274 = vmatprep.subr.bf16.mxu0 0
      %1275 = vmatpush1.bf16.msra.mxu0 0
      %1276 = vmatprep.subr.bf16.mxu0 0
      %1277 = vmatpush1.bf16.msra.mxu0 0
      %1278 = vmatprep.mubr.bf16.mxu0 0
      %1279 = vmatmul.mubr.bf16.gmra.mrb[0].mxu0 %v945
      %v1280 = vpop.f32.mrb[0].mxu0
      %v1281 = vadd.f32 0.0, %v1280
      %v1282 = vpop.f32.mrb[0].mxu0
      %v1283 = vpop.f32.mrb[0].mxu0
      %v1284 = vpop.f32.mrb[0].mxu0
      %1285 = vdwg.mxu0
      %1286 = vmatprep.subr.bf16.mxu0 0
      %1287 = vmatpush1.bf16.msra.mxu0 %v1100
      %1288 = vmatprep.subr.bf16.mxu0 0
      %1289 = vmatpush1.bf16.msra.mxu0 %v1101
      %1290 = vmatprep.subr.bf16.mxu0 0
      %1291 = vmatpush1.bf16.msra.mxu0 %v1102
      %1292 = vmatprep.subr.bf16.mxu0 0
      %1293 = vmatpush1.bf16.msra.mxu0 %v1103
      %1294 = vmatprep.subr.bf16.mxu0 0
      %1295 = vmatpush1.bf16.msra.mxu0 %v1104
      %1296 = vmatprep.subr.bf16.mxu0 0
      %1297 = vmatpush1.bf16.msra.mxu0 %v1105
      %1298 = vmatprep.subr.bf16.mxu0 0
      %1299 = vmatpush1.bf16.msra.mxu0 %v1106
      %1300 = vmatprep.subr.bf16.mxu0 0
      %1301 = vmatpush1.bf16.msra.mxu0 %v1107
      %1302 = vmatprep.subr.bf16.mxu0 0
      %1303 = vmatpush1.bf16.msra.mxu0 0
      %1304 = vmatprep.subr.bf16.mxu0 0
      %1305 = vmatpush1.bf16.msra.mxu0 0
      %1306 = vmatprep.subr.bf16.mxu0 0
      %1307 = vmatpush1.bf16.msra.mxu0 0
      %1308 = vmatprep.subr.bf16.mxu0 0
      %1309 = vmatpush1.bf16.msra.mxu0 0
      %1310 = vmatprep.subr.bf16.mxu0 0
      %1311 = vmatpush1.bf16.msra.mxu0 0
      %1312 = vmatprep.subr.bf16.mxu0 0
      %1313 = vmatpush1.bf16.msra.mxu0 0
      %1314 = vmatprep.subr.bf16.mxu0 0
      %1315 = vmatpush1.bf16.msra.mxu0 0
      %1316 = vmatprep.subr.bf16.mxu0 0
      %1317 = vmatpush1.bf16.msra.mxu0 0
      %1318 = vmatprep.mubr.bf16.mxu0 0
      %1319 = vmatmul.mubr.bf16.gmra.mrb[0].mxu0 %v933
      %v1320 = vpop.f32.mrb[0].mxu0
      %v1321 = vadd.f32 %v1281, %v1320
      %v1322 = vpop.f32.mrb[0].mxu0
      %v1323 = vpop.f32.mrb[0].mxu0
      %v1324 = vpop.f32.mrb[0].mxu0
      %1325 = vdwg.mxu0
      %v1326 = vadd.f32 %v1321, %v1160
      %1327 = vst [vmem:[%s251 + $0x10] sm:$0xff] %v1326
      %1328 = vmatprep.subr.bf16.mxu0 0
      %1329 = vmatpush1.bf16.msra.mxu0 %v1012
      %1330 = vmatprep.subr.bf16.mxu0 0
      %1331 = vmatpush1.bf16.msra.mxu0 %v1013
      %1332 = vmatprep.subr.bf16.mxu0 0
      %1333 = vmatpush1.bf16.msra.mxu0 %v1014
      %1334 = vmatprep.subr.bf16.mxu0 0
      %1335 = vmatpush1.bf16.msra.mxu0 %v1015
      %1336 = vmatprep.subr.bf16.mxu0 0
      %1337 = vmatpush1.bf16.msra.mxu0 %v1016
      %1338 = vmatprep.subr.bf16.mxu0 0
      %1339 = vmatpush1.bf16.msra.mxu0 %v1017
      %1340 = vmatprep.subr.bf16.mxu0 0
      %1341 = vmatpush1.bf16.msra.mxu0 %v1018
      %1342 = vmatprep.subr.bf16.mxu0 0
      %1343 = vmatpush1.bf16.msra.mxu0 %v1019
      %1344 = vmatprep.subr.bf16.mxu0 0
      %1345 = vmatpush1.bf16.msra.mxu0 0
      %1346 = vmatprep.subr.bf16.mxu0 0
      %1347 = vmatpush1.bf16.msra.mxu0 0
      %1348 = vmatprep.subr.bf16.mxu0 0
      %1349 = vmatpush1.bf16.msra.mxu0 0
      %1350 = vmatprep.subr.bf16.mxu0 0
      %1351 = vmatpush1.bf16.msra.mxu0 0
      %1352 = vmatprep.subr.bf16.mxu0 0
      %1353 = vmatpush1.bf16.msra.mxu0 0
      %1354 = vmatprep.subr.bf16.mxu0 0
      %1355 = vmatpush1.bf16.msra.mxu0 0
      %1356 = vmatprep.subr.bf16.mxu0 0
      %1357 = vmatpush1.bf16.msra.mxu0 0
      %1358 = vmatprep.subr.bf16.mxu0 0
      %1359 = vmatpush1.bf16.msra.mxu0 0
      %1360 = vmatprep.mubr.bf16.mxu0 0
      %1361 = vmatmul.mubr.bf16.gmra.mrb[0].mxu0 %v946
      %v1362 = vpop.f32.mrb[0].mxu0
      %v1363 = vadd.f32 0.0, %v1362
      %v1364 = vpop.f32.mrb[0].mxu0
      %v1365 = vpop.f32.mrb[0].mxu0
      %v1366 = vpop.f32.mrb[0].mxu0
      %1367 = vdwg.mxu0
      %1368 = vmatprep.subr.bf16.mxu0 0
      %1369 = vmatpush1.bf16.msra.mxu0 %v1100
      %1370 = vmatprep.subr.bf16.mxu0 0
      %1371 = vmatpush1.bf16.msra.mxu0 %v1101
      %1372 = vmatprep.subr.bf16.mxu0 0
      %1373 = vmatpush1.bf16.msra.mxu0 %v1102
      %1374 = vmatprep.subr.bf16.mxu0 0
      %1375 = vmatpush1.bf16.msra.mxu0 %v1103
      %1376 = vmatprep.subr.bf16.mxu0 0
      %1377 = vmatpush1.bf16.msra.mxu0 %v1104
      %1378 = vmatprep.subr.bf16.mxu0 0
      %1379 = vmatpush1.bf16.msra.mxu0 %v1105
      %1380 = vmatprep.subr.bf16.mxu0 0
      %1381 = vmatpush1.bf16.msra.mxu0 %v1106
      %1382 = vmatprep.subr.bf16.mxu0 0
      %1383 = vmatpush1.bf16.msra.mxu0 %v1107
      %1384 = vmatprep.subr.bf16.mxu0 0
      %1385 = vmatpush1.bf16.msra.mxu0 0
      %1386 = vmatprep.subr.bf16.mxu0 0
      %1387 = vmatpush1.bf16.msra.mxu0 0
      %1388 = vmatprep.subr.bf16.mxu0 0
      %1389 = vmatpush1.bf16.msra.mxu0 0
      %1390 = vmatprep.subr.bf16.mxu0 0
      %1391 = vmatpush1.bf16.msra.mxu0 0
      %1392 = vmatprep.subr.bf16.mxu0 0
      %1393 = vmatpush1.bf16.msra.mxu0 0
      %1394 = vmatprep.subr.bf16.mxu0 0
      %1395 = vmatpush1.bf16.msra.mxu0 0
      %1396 = vmatprep.subr.bf16.mxu0 0
      %1397 = vmatpush1.bf16.msra.mxu0 0
      %1398 = vmatprep.subr.bf16.mxu0 0
      %1399 = vmatpush1.bf16.msra.mxu0 0
      %1400 = vmatprep.mubr.bf16.mxu0 0
      %1401 = vmatmul.mubr.bf16.gmra.mrb[0].mxu0 %v934
      %v1402 = vpop.f32.mrb[0].mxu0
      %v1403 = vadd.f32 %v1363, %v1402
      %v1404 = vpop.f32.mrb[0].mxu0
      %v1405 = vpop.f32.mrb[0].mxu0
      %v1406 = vpop.f32.mrb[0].mxu0
      %1407 = vdwg.mxu0
      %v1408 = vadd.f32 %v1403, %v1160
      %1409 = vst [vmem:[%s251 + $0x18] sm:$0xff] %v1408
      %p1410 = scmp.lt.s32.totalorder %s17, 1
      %s1411 = scalar_select %p1410, %s17, 1
      %s1412 = smul.addr %s1411, 4
      %s1413 = smul.addr %s1412, 8
      %s1414 = scalar_lea.vmem %s6, %s1413
      // Predicated region
      $region45: #{patch_merge_forward.1} parent=43 // pred_check
        %p1415 = pneg %p166
      $region46: #{patch_merge_forward.1} parent=43 // pred_check_branch
        %1417 = sbr.rel (%p1415) target = $region48
      $region47: #{patch_merge_forward.1} parent=43 // pred_region
        _
      $region48: #{patch_merge_forward.1} parent=43 // pred_fallthru
        _
    $region44: #{patch_merge_forward.1} parent=5 // pred_fallthru
      _
    %p1418 = scmp.le.s32.totalorder 2, %s12
    // Predicated region
    $region49: #{patch_merge_forward.1} parent=5 // pred_check
      %p1419 = pneg %p1418
    $region50: #{patch_merge_forward.1} parent=5 // pred_check_branch
      %1421 = sbr.rel (%p1419) target = $region52
    $region51: #{patch_merge_forward.1} parent=5 // pred_region
      %s1422 = ssub.s32 %s12, 2
      // Predicated region
      $region53: #{patch_merge_forward.1} parent=51 // pred_check
        %p1423 = pneg %p172
      $region54: #{patch_merge_forward.1} parent=51 // pred_check_branch
        %1425 = sbr.rel (%p1423) target = $region56
      $region55: #{patch_merge_forward.1} parent=51 // pred_region
        %p1426 = scmp.lt.s32.totalorder %s18, 1
        %s1427 = scalar_select %p1426, %s18, 1
        %s1428 = smul.addr %s1427, 4
        %s1429 = smul.addr %s1428, 8
        %s1430 = scalar_lea.vmem %s6, %s1429
      $region56: #{patch_merge_forward.1} parent=51 // pred_fallthru
        _
    $region52: #{patch_merge_forward.1} parent=5 // pred_fallthru
      _
  $region6: #{patch_merge_forward.1} parent=0 // loop_footer
    %s16 = sadd.s32 1, %s12
  $region7: #{patch_merge_forward.1} parent=0 // loop_footer_branch
    %11 = sbr.rel target = $region3
  $region8: #{patch_merge_forward.1} parent=0 // loop_exit
    _

</llo_original>
